<compile_context>
chip_gen: v7x
topology: tpu7x:2x2x1
jax: 0.10.0
libtpu: 0.0.40
codegen_flags: <defaults>
</compile_context>

<pallas_src>
import functools

import jax
import jax.numpy as jnp
from jax.experimental import pallas as pl
from jax.experimental.pallas import tpu as pltpu

# ---- module hyper-parameters (from VAERewardDecomposer.__init__ defaults) ----
OBS_DIM = 32          # args.obs_dim
INTER_DIM = 256       # VAE inter_dim
LATENT_DIM = 4        # args.IB_latent_dim
REWARD_HIDDEN = 64    # Reward_Model hidden_dim
KL_WEIGHT = 0.1       # args.kl_weight
ROW_BLOCK = 512       # rows per grid step (multiple of 8; keeps grid >= 2 on v7x)
OUT_LANES = 8         # packed output slab: [z(4) | reward | recon_err | kl | 0]


def vae_reward_kernel(x_ref, eps_ref,
                      ew1, eb1, ew2, eb2,                 # VAE encoder
                      dwr1, dbr1,                         # fused dec-L1 || reward-L1
                      dw2, db2, dw3, db3,                 # VAE decoder (rest)
                      rw2, rb2, rw3, rb3, rw4, rb4,       # reward MLP hidden layers
                      rw5, rb5,                           # reward output layer
                      out_ref, *, edt):
    f32 = jnp.float32
    cdt = ew1.dtype                         # MXU input dtype (bf16 or f32)

    def mm(a, w_ref):                       # MXU matmul, f32 accumulate
        return jnp.dot(a.astype(cdt), w_ref[...], preferred_element_type=f32)

    def act(acc, b_ref):                    # bias-add + ReLU in elementwise dtype
        return jnp.maximum(acc.astype(edt) + b_ref[...].astype(edt), 0.0)

    x = x_ref[...]                          # (RB, OBS_DIM), f32

    # ---- VAE encoder: Linear -> ReLU -> Linear -> chunk(mu, logvar) ----
    h = act(mm(x, ew1), eb1)
    enc = mm(h, ew2) + eb2[...]             # (RB, 2*LATENT_DIM), f32
    mu = enc[:, :LATENT_DIM]
    logvar = enc[:, LATENT_DIM:]

    # ---- reparameterise: z = mu + eps * exp(logvar / 2) (single EUP exp) ----
    std = jnp.exp(logvar * 0.5)
    z = mu + eps_ref[...] * std

    # ---- fused z-consumer: decoder layer-1 (256) || reward layer-1 (64) ----
    zc = act(mm(z, dwr1), dbr1)             # (RB, INTER_DIM + REWARD_HIDDEN)
    dec = zc[:, :INTER_DIM]
    r = zc[:, INTER_DIM:]

    # ---- VAE decoder (remaining layers) ----
    dec = act(mm(dec, dw2), db2)
    recon = mm(dec, dw3) + db3[...]         # (RB, OBS_DIM), f32

    # ---- Reward_Model remaining hidden layers ----
    r = act(mm(r, rw2), rb2)
    r = act(mm(r, rw3), rb3)
    r = act(mm(r, rw4), rb4)
    # Final width-1 layer as VPU multiply + lane reduce (frees the MXU / MRF).
    reward = jnp.sum(r.astype(f32) * rw5[...], axis=-1, keepdims=True) + rb5[...]

    # ---- fused per-row loss partials (recon / mu / logvar never hit HBM) ----
    recon_err = jnp.sum((recon - x) ** 2, axis=-1, keepdims=True)        # (RB, 1)
    kl_row = -0.5 * jnp.sum(1.0 + logvar - mu * mu - std * std,
                            axis=-1, keepdims=True)                      # (RB, 1)

    # ---- pack into one lane-dense output slab ----
    # lanes [0:L) = z (direct lane pad), L = reward, L+1 = recon_err, L+2 = kl.
    lane = jax.lax.broadcasted_iota(jnp.int32, (1, OUT_LANES), 1)

    def place(col, c):                      # (RB, 1) f32 -> (RB, OUT_LANES)
        return col * (lane == c).astype(f32)

    zero_tail = jnp.zeros((z.shape[0], OUT_LANES - LATENT_DIM), f32)
    packed = jnp.concatenate([z, zero_tail], axis=-1)
    packed = packed + place(reward, LATENT_DIM)
    packed = packed + place(recon_err, LATENT_DIM + 1)
    packed = packed + place(kl_row, LATENT_DIM + 2)
    out_ref[...] = packed


def init_params(key):
    """Deterministic parameter init (kaiming-style scaling).

    Weights stored (in_dim, out_dim) -- transpose of torch.nn.Linear --
    except the final reward layer, kept in torch (out=1, in=hidden) layout.
    """
    dims = [
        # VAE encoder
        (OBS_DIM, INTER_DIM), (INTER_DIM, 2 * LATENT_DIM),
        # VAE decoder
        (LATENT_DIM, INTER_DIM), (INTER_DIM, INTER_DIM), (INTER_DIM, OBS_DIM),
        # reward model (n_layers = 5, output_dim = 1): first 4 layers here
        (LATENT_DIM, REWARD_HIDDEN), (REWARD_HIDDEN, REWARD_HIDDEN),
        (REWARD_HIDDEN, REWARD_HIDDEN), (REWARD_HIDDEN, REWARD_HIDDEN),
    ]
    keys = jax.random.split(key, len(dims) + 1)
    params = []
    for k, (fin, fout) in zip(keys[:-1], dims):
        w = jax.random.normal(k, (fin, fout), jnp.float32) * (1.0 / fin ** 0.5)
        params += [w, jnp.zeros((1, fout), jnp.float32)]
    w5 = (jax.random.normal(keys[-1], (1, REWARD_HIDDEN), jnp.float32)
          * (1.0 / REWARD_HIDDEN ** 0.5))
    params += [w5, jnp.zeros((1, 1), jnp.float32)]
    return params


def _default_elem_dtype(compute_dtype):
    """bf16 elementwise only where the VPU/EUP supports it (v6e / v7x)."""
    if compute_dtype == jnp.float32:
        return jnp.float32
    try:
        kind = jax.devices()[0].device_kind.lower()
    except Exception:
        return jnp.float32
    if ("v6" in kind) or ("v7" in kind):
        return compute_dtype
    return jnp.float32   # v5e and older: keep elementwise math in f32


def _pack_params(params, compute_dtype, elem_dtype):
    """Cast weights for the MXU, hidden biases for the VPU, fuse dec-L1||rew-L1."""
    (ew1, eb1, ew2, eb2, dw1, db1, dw2, db2, dw3, db3,
     rw1, rb1, rw2, rb2, rw3, rb3, rw4, rb4, rw5, rb5) = params
    cdt, edt, f32 = compute_dtype, elem_dtype, jnp.float32
    dwr1 = jnp.concatenate([dw1, rw1], axis=1).astype(cdt)   # (LATENT, 256+64)
    dbr1 = jnp.concatenate([db1, rb1], axis=1).astype(edt)   # (1, 320)
    return [
        ew1.astype(cdt), eb1.astype(edt), ew2.astype(cdt), eb2.astype(f32),
        dwr1, dbr1,
        dw2.astype(cdt), db2.astype(edt), dw3.astype(cdt), db3.astype(f32),
        rw2.astype(cdt), rb2.astype(edt), rw3.astype(cdt), rb3.astype(edt),
        rw4.astype(cdt), rb4.astype(edt),
        rw5.astype(f32), rb5.astype(f32),
    ]


@functools.partial(jax.jit,
                   static_argnames=("row_block", "compute_dtype", "elem_dtype"))
def _forward_impl(states, eps, params, row_block, compute_dtype, elem_dtype):
    b, na, t, d = states.shape
    n = b * na * t
    # Shrink the tile for tiny batches; never demand divisibility (ragged tail
    # rows are masked by Pallas and never reduced over).
    rb = min(row_block, max(8, -(-n // 8) * 8))
    grid = (pl.cdiv(n, rb),)

    x = states.reshape(n, d).astype(jnp.float32)        # no pad, no extra HBM pass
    e = eps.reshape(n, LATENT_DIM).astype(jnp.float32)
    cparams = _pack_params(params, compute_dtype, elem_dtype)

    def row_spec(cols):
        return pl.BlockSpec((rb, cols), lambda i: (i, 0))

    # Weight index_maps are constant -> Pallas re-uses the resident copies.
    param_specs = [pl.BlockSpec(p.shape, lambda i: (0, 0)) for p in cparams]

    packed = pl.pallas_call(
        functools.partial(vae_reward_kernel, edt=elem_dtype),
        out_shape=jax.ShapeDtypeStruct((n, OUT_LANES), jnp.float32),
        grid_spec=pltpu.PrefetchScalarGridSpec(
            num_scalar_prefetch=0,
            grid=grid,
            in_specs=[row_spec(d), row_spec(LATENT_DIM)] + param_specs,
            out_specs=row_spec(OUT_LANES),
        ),
        compiler_params=pltpu.CompilerParams(
            dimension_semantics=("parallel",)),
    )(x, e, *cparams)

    z = packed[:, :LATENT_DIM]
    reward = packed[:, LATENT_DIM:LATENT_DIM + 1]
    recon_err = packed[:, LATENT_DIM + 1]
    kl_row = packed[:, LATENT_DIM + 2]

    # ---- scalar loss reductions over per-row partials (tiny glue) ----
    recon_loss = jnp.sum(recon_err) / (n * d)
    kl_loss = jnp.mean(kl_row)
    vae_loss = recon_loss + KL_WEIGHT * kl_loss

    rewards = reward.reshape(b, na, t, 1)
    tensor_scores = z.reshape(b, na, t, LATENT_DIM)
    return rewards, tensor_scores, kl_loss, recon_loss, vae_loss


def vae_reward_forward(states, eps, params, row_block=ROW_BLOCK,
                       compute_dtype=jnp.bfloat16, elem_dtype=None):
    if elem_dtype is None:
        elem_dtype = _default_elem_dtype(compute_dtype)
    return _forward_impl(states, eps, params, row_block, compute_dtype, elem_dtype)


def reference_forward(states, eps, params, compute_dtype=jnp.float32,
                      elem_dtype=jnp.float32):
    """Pure-JAX reference mirroring the kernel's dtype policy."""
    (ew1, eb1, ew2, eb2, dw1, db1, dw2, db2, dw3, db3,
     rw1, rb1, rw2, rb2, rw3, rb3, rw4, rb4, rw5, rb5) = params
    cdt, edt, f32 = compute_dtype, elem_dtype, jnp.float32

    def mm(a, w):
        return jnp.dot(a.astype(cdt), w.astype(cdt),
                       preferred_element_type=f32,
                       precision=jax.lax.Precision.HIGHEST)

    def act(acc, bias):
        return jnp.maximum(acc.astype(edt) + bias.astype(edt), 0.0)

    b, na, t, d = states.shape
    x = states.reshape(-1, d).astype(f32)
    e = eps.reshape(-1, LATENT_DIM).astype(f32)

    h = act(mm(x, ew1), eb1)
    enc = mm(h, ew2) + eb2
    mu, logvar = enc[:, :LATENT_DIM], enc[:, LATENT_DIM:]
    std = jnp.exp(logvar * 0.5)
    z = mu + e * std

    dec = act(mm(z, dw1), db1)
    dec = act(mm(dec, dw2), db2)
    recon = mm(dec, dw3) + db3

    r = act(mm(z, rw1), rb1)
    r = act(mm(r, rw2), rb2)
    r = act(mm(r, rw3), rb3)
    r = act(mm(r, rw4), rb4)
    reward = jnp.sum(r.astype(f32) * rw5, axis=-1, keepdims=True) + rb5

    recon_loss = jnp.mean((recon - x) ** 2)
    kl_loss = jnp.mean(-0.5 * jnp.sum(1.0 + logvar - mu * mu - std * std,
                                      axis=-1))
    vae_loss = recon_loss + KL_WEIGHT * kl_loss
    return (reward.reshape(b, na, t, 1), z.reshape(b, na, t, LATENT_DIM),
            kl_loss, recon_loss, vae_loss)


def _check(got, want, rtol, atol, tag):
    for i, (g, w) in enumerate(zip(got, want)):
        g = jnp.asarray(g)
        w = jnp.asarray(w)
        ok = bool(jnp.allclose(g, w, rtol=rtol, atol=atol))
        assert ok, (tag, i, float(jnp.max(jnp.abs(g - w))))


if __name__ == "__main__":
    key = jax.random.PRNGKey(0)
    k_params, k_states, k_eps = jax.random.split(key, 3)
    params = init_params(k_params)

    # Small shape consistent with the module's (b, n_agents, t, obs_dim) layout.
    b, na, t = 2, 3, 8
    states = jax.random.normal(k_states, (b, na, t, OBS_DIM), jnp.float32)
    eps = jax.random.normal(k_eps, (b, na, t, LATENT_DIM), jnp.float32)

    # 1) f32 path: exact module semantics.
    out_f32 = jax.block_until_ready(
        vae_reward_forward(states, eps, params, compute_dtype=jnp.float32))
    ref_f32 = reference_forward(states, eps, params, compute_dtype=jnp.float32)
    assert out_f32[0].shape == (b, na, t, 1)
    assert out_f32[1].shape == (b, na, t, LATENT_DIM)
    _check(out_f32, ref_f32, rtol=1e-4, atol=1e-4, tag="f32")

    # 2) bf16 MXU path (elementwise dtype auto-selected per chip generation).
    edt = _default_elem_dtype(jnp.bfloat16)
    out_bf16 = jax.block_until_ready(
        vae_reward_forward(states, eps, params,
                           compute_dtype=jnp.bfloat16, elem_dtype=edt))
    ref_bf16 = reference_forward(states, eps, params,
                                 compute_dtype=jnp.bfloat16, elem_dtype=edt)
    _check(out_bf16, ref_bf16, rtol=3e-3, atol=3e-3, tag="bf16")

    # 3) Larger N not divisible by ROW_BLOCK: multi-block grid + ragged tail.
    b2, na2, t2 = 3, 4, 50                      # N = 600 -> 2 grid steps (512 + 88)
    states2 = jax.random.normal(jax.random.PRNGKey(1), (b2, na2, t2, OBS_DIM),
                                jnp.float32)
    eps2 = jax.random.normal(jax.random.PRNGKey(2), (b2, na2, t2, LATENT_DIM),
                             jnp.float32)
    out2 = jax.block_until_ready(
        vae_reward_forward(states2, eps2, params,
                           compute_dtype=jnp.bfloat16, elem_dtype=edt))
    ref2 = reference_forward(states2, eps2, params,
                             compute_dtype=jnp.bfloat16, elem_dtype=edt)
    _check(out2, ref2, rtol=3e-3, atol=3e-3, tag="bf16-large")

    print("KERNEL_OK")
</pallas_src>

<mosaic_0001>
module attributes {stable_mosaic.version = 11 : i64} {
  func.func @vae_reward_kernel(%arg0: i32, %arg1: memref<48x32xf32, #tpu.memory_space<vmem>>, %arg2: memref<48x4xf32, #tpu.memory_space<vmem>>, %arg3: memref<32x256xf32, #tpu.memory_space<vmem>>, %arg4: memref<1x256xf32, #tpu.memory_space<vmem>>, %arg5: memref<256x8xf32, #tpu.memory_space<vmem>>, %arg6: memref<1x8xf32, #tpu.memory_space<vmem>>, %arg7: memref<4x320xf32, #tpu.memory_space<vmem>>, %arg8: memref<1x320xf32, #tpu.memory_space<vmem>>, %arg9: memref<256x256xf32, #tpu.memory_space<vmem>>, %arg10: memref<1x256xf32, #tpu.memory_space<vmem>>, %arg11: memref<256x32xf32, #tpu.memory_space<vmem>>, %arg12: memref<1x32xf32, #tpu.memory_space<vmem>>, %arg13: memref<64x64xf32, #tpu.memory_space<vmem>>, %arg14: memref<1x64xf32, #tpu.memory_space<vmem>>, %arg15: memref<64x64xf32, #tpu.memory_space<vmem>>, %arg16: memref<1x64xf32, #tpu.memory_space<vmem>>, %arg17: memref<64x64xf32, #tpu.memory_space<vmem>>, %arg18: memref<1x64xf32, #tpu.memory_space<vmem>>, %arg19: memref<1x64xf32, #tpu.memory_space<vmem>>, %arg20: memref<1x1xf32, #tpu.memory_space<vmem>>, %arg21: memref<48x8xf32, #tpu.memory_space<vmem>>) attributes {dimension_semantics = [#tpu.dimension_semantics<parallel>], iteration_bounds = array<i64: 1>, scalar_prefetch = 0 : i64, scratch_operands = 0 : i64, tpu.core_type = #tpu.core_type<tc>, window_params = [{transform_indices = @transform_0, window_bounds = array<i64: 48, 32>}, {transform_indices = @transform_1, window_bounds = array<i64: 48, 4>}, {pipeline_mode = #tpu.pipeline_mode<synchronous>, transform_indices = @transform_2, window_bounds = array<i64: 32, 256>}, {pipeline_mode = #tpu.pipeline_mode<synchronous>, transform_indices = @transform_3, window_bounds = array<i64: 1, 256>}, {pipeline_mode = #tpu.pipeline_mode<synchronous>, transform_indices = @transform_4, window_bounds = array<i64: 256, 8>}, {pipeline_mode = #tpu.pipeline_mode<synchronous>, transform_indices = @transform_5, window_bounds = array<i64: 1, 8>}, {pipeline_mode = #tpu.pipeline_mode<synchronous>, transform_indices = @transform_6, window_bounds = array<i64: 4, 320>}, {pipeline_mode = #tpu.pipeline_mode<synchronous>, transform_indices = @transform_7, window_bounds = array<i64: 1, 320>}, {pipeline_mode = #tpu.pipeline_mode<synchronous>, transform_indices = @transform_8, window_bounds = array<i64: 256, 256>}, {pipeline_mode = #tpu.pipeline_mode<synchronous>, transform_indices = @transform_9, window_bounds = array<i64: 1, 256>}, {pipeline_mode = #tpu.pipeline_mode<synchronous>, transform_indices = @transform_10, window_bounds = array<i64: 256, 32>}, {pipeline_mode = #tpu.pipeline_mode<synchronous>, transform_indices = @transform_11, window_bounds = array<i64: 1, 32>}, {pipeline_mode = #tpu.pipeline_mode<synchronous>, transform_indices = @transform_12, window_bounds = array<i64: 64, 64>}, {pipeline_mode = #tpu.pipeline_mode<synchronous>, transform_indices = @transform_13, window_bounds = array<i64: 1, 64>}, {pipeline_mode = #tpu.pipeline_mode<synchronous>, transform_indices = @transform_14, window_bounds = array<i64: 64, 64>}, {pipeline_mode = #tpu.pipeline_mode<synchronous>, transform_indices = @transform_15, window_bounds = array<i64: 1, 64>}, {pipeline_mode = #tpu.pipeline_mode<synchronous>, transform_indices = @transform_16, window_bounds = array<i64: 64, 64>}, {pipeline_mode = #tpu.pipeline_mode<synchronous>, transform_indices = @transform_17, window_bounds = array<i64: 1, 64>}, {pipeline_mode = #tpu.pipeline_mode<synchronous>, transform_indices = @transform_18, window_bounds = array<i64: 1, 64>}, {pipeline_mode = #tpu.pipeline_mode<synchronous>, transform_indices = @transform_19, window_bounds = array<i64: 1, 1>}, {transform_indices = @transform_20, window_bounds = array<i64: 48, 8>}]} {
    %c0 = arith.constant 0 : index
    %c0_0 = arith.constant 0 : index
    %0 = vector.load %arg1[%c0, %c0_0] : memref<48x32xf32, #tpu.memory_space<vmem>>, vector<48x32xf32>
    %c0_1 = arith.constant 0 : index
    %c0_2 = arith.constant 0 : index
    %1 = vector.load %arg3[%c0_1, %c0_2] : memref<32x256xf32, #tpu.memory_space<vmem>>, vector<32x256xf32>
    %cst = arith.constant dense<0.000000e+00> : vector<48x256xf32>
    %2 = tpu.matmul %0, %1, %cst {dimension_numbers = #tpu.dot_dimension_numbers<[1], [0], [0], [1], [0, 0, 1, 1], [], []>} : vector<48x32xf32>, vector<32x256xf32>, vector<48x256xf32> -> vector<48x256xf32>
    %c0_3 = arith.constant 0 : index
    %c0_4 = arith.constant 0 : index
    %3 = vector.load %arg4[%c0_3, %c0_4] : memref<1x256xf32, #tpu.memory_space<vmem>>, vector<1x256xf32>
    %4 = vector.broadcast %3 : vector<1x256xf32> to vector<48x256xf32>
    %5 = arith.addf %2, %4 : vector<48x256xf32>
    %cst_5 = arith.constant 0.000000e+00 : f32
    %6 = vector.broadcast %cst_5 : f32 to vector<48x256xf32>
    %7 = arith.maximumf %5, %6 : vector<48x256xf32>
    %c0_6 = arith.constant 0 : index
    %c0_7 = arith.constant 0 : index
    %8 = vector.load %arg5[%c0_6, %c0_7] : memref<256x8xf32, #tpu.memory_space<vmem>>, vector<256x8xf32>
    %cst_8 = arith.constant dense<0.000000e+00> : vector<48x8xf32>
    %9 = tpu.matmul %7, %8, %cst_8 {dimension_numbers = #tpu.dot_dimension_numbers<[1], [0], [0], [1], [0, 0, 1, 1], [], []>} : vector<48x256xf32>, vector<256x8xf32>, vector<48x8xf32> -> vector<48x8xf32>
    %c0_9 = arith.constant 0 : index
    %c0_10 = arith.constant 0 : index
    %10 = vector.load %arg6[%c0_9, %c0_10] : memref<1x8xf32, #tpu.memory_space<vmem>>, vector<1x8xf32>
    %11 = vector.broadcast %10 : vector<1x8xf32> to vector<48x8xf32>
    %12 = arith.addf %9, %11 : vector<48x8xf32>
    %13 = vector.extract_strided_slice %12 {offsets = [0, 0], sizes = [48, 4], strides = [1, 1]} : vector<48x8xf32> to vector<48x4xf32>
    %14 = vector.extract_strided_slice %12 {offsets = [0, 4], sizes = [48, 4], strides = [1, 1]} : vector<48x8xf32> to vector<48x4xf32>
    %cst_11 = arith.constant 5.000000e-01 : f32
    %15 = vector.broadcast %cst_11 : f32 to vector<48x4xf32>
    %16 = arith.mulf %14, %15 : vector<48x4xf32>
    %17 = math.exp %16 : vector<48x4xf32>
    %c0_12 = arith.constant 0 : index
    %c0_13 = arith.constant 0 : index
    %18 = vector.load %arg2[%c0_12, %c0_13] : memref<48x4xf32, #tpu.memory_space<vmem>>, vector<48x4xf32>
    %19 = arith.mulf %18, %17 : vector<48x4xf32>
    %20 = arith.addf %13, %19 : vector<48x4xf32>
    %c0_14 = arith.constant 0 : index
    %c0_15 = arith.constant 0 : index
    %21 = vector.load %arg7[%c0_14, %c0_15] : memref<4x320xf32, #tpu.memory_space<vmem>>, vector<4x320xf32>
    %cst_16 = arith.constant dense<0.000000e+00> : vector<48x320xf32>
    %22 = tpu.matmul %20, %21, %cst_16 {dimension_numbers = #tpu.dot_dimension_numbers<[1], [0], [0], [1], [0, 0, 1, 1], [], []>} : vector<48x4xf32>, vector<4x320xf32>, vector<48x320xf32> -> vector<48x320xf32>
    %c0_17 = arith.constant 0 : index
    %c0_18 = arith.constant 0 : index
    %23 = vector.load %arg8[%c0_17, %c0_18] : memref<1x320xf32, #tpu.memory_space<vmem>>, vector<1x320xf32>
    %24 = vector.broadcast %23 : vector<1x320xf32> to vector<48x320xf32>
    %25 = arith.addf %22, %24 : vector<48x320xf32>
    %cst_19 = arith.constant 0.000000e+00 : f32
    %26 = vector.broadcast %cst_19 : f32 to vector<48x320xf32>
    %27 = arith.maximumf %25, %26 : vector<48x320xf32>
    %28 = vector.extract_strided_slice %27 {offsets = [0, 0], sizes = [48, 256], strides = [1, 1]} : vector<48x320xf32> to vector<48x256xf32>
    %29 = vector.extract_strided_slice %27 {offsets = [0, 256], sizes = [48, 64], strides = [1, 1]} : vector<48x320xf32> to vector<48x64xf32>
    %c0_20 = arith.constant 0 : index
    %c0_21 = arith.constant 0 : index
    %30 = vector.load %arg9[%c0_20, %c0_21] : memref<256x256xf32, #tpu.memory_space<vmem>>, vector<256x256xf32>
    %cst_22 = arith.constant dense<0.000000e+00> : vector<48x256xf32>
    %31 = tpu.matmul %28, %30, %cst_22 {dimension_numbers = #tpu.dot_dimension_numbers<[1], [0], [0], [1], [0, 0, 1, 1], [], []>} : vector<48x256xf32>, vector<256x256xf32>, vector<48x256xf32> -> vector<48x256xf32>
    %c0_23 = arith.constant 0 : index
    %c0_24 = arith.constant 0 : index
    %32 = vector.load %arg10[%c0_23, %c0_24] : memref<1x256xf32, #tpu.memory_space<vmem>>, vector<1x256xf32>
    %33 = vector.broadcast %32 : vector<1x256xf32> to vector<48x256xf32>
    %34 = arith.addf %31, %33 : vector<48x256xf32>
    %cst_25 = arith.constant 0.000000e+00 : f32
    %35 = vector.broadcast %cst_25 : f32 to vector<48x256xf32>
    %36 = arith.maximumf %34, %35 : vector<48x256xf32>
    %c0_26 = arith.constant 0 : index
    %c0_27 = arith.constant 0 : index
    %37 = vector.load %arg11[%c0_26, %c0_27] : memref<256x32xf32, #tpu.memory_space<vmem>>, vector<256x32xf32>
    %cst_28 = arith.constant dense<0.000000e+00> : vector<48x32xf32>
    %38 = tpu.matmul %36, %37, %cst_28 {dimension_numbers = #tpu.dot_dimension_numbers<[1], [0], [0], [1], [0, 0, 1, 1], [], []>} : vector<48x256xf32>, vector<256x32xf32>, vector<48x32xf32> -> vector<48x32xf32>
    %c0_29 = arith.constant 0 : index
    %c0_30 = arith.constant 0 : index
    %39 = vector.load %arg12[%c0_29, %c0_30] : memref<1x32xf32, #tpu.memory_space<vmem>>, vector<1x32xf32>
    %40 = vector.broadcast %39 : vector<1x32xf32> to vector<48x32xf32>
    %41 = arith.addf %38, %40 : vector<48x32xf32>
    %c0_31 = arith.constant 0 : index
    %c0_32 = arith.constant 0 : index
    %42 = vector.load %arg13[%c0_31, %c0_32] : memref<64x64xf32, #tpu.memory_space<vmem>>, vector<64x64xf32>
    %cst_33 = arith.constant dense<0.000000e+00> : vector<48x64xf32>
    %43 = tpu.matmul %29, %42, %cst_33 {dimension_numbers = #tpu.dot_dimension_numbers<[1], [0], [0], [1], [0, 0, 1, 1], [], []>} : vector<48x64xf32>, vector<64x64xf32>, vector<48x64xf32> -> vector<48x64xf32>
    %c0_34 = arith.constant 0 : index
    %c0_35 = arith.constant 0 : index
    %44 = vector.load %arg14[%c0_34, %c0_35] : memref<1x64xf32, #tpu.memory_space<vmem>>, vector<1x64xf32>
    %45 = vector.broadcast %44 : vector<1x64xf32> to vector<48x64xf32>
    %46 = arith.addf %43, %45 : vector<48x64xf32>
    %cst_36 = arith.constant 0.000000e+00 : f32
    %47 = vector.broadcast %cst_36 : f32 to vector<48x64xf32>
    %48 = arith.maximumf %46, %47 : vector<48x64xf32>
    %c0_37 = arith.constant 0 : index
    %c0_38 = arith.constant 0 : index
    %49 = vector.load %arg15[%c0_37, %c0_38] : memref<64x64xf32, #tpu.memory_space<vmem>>, vector<64x64xf32>
    %cst_39 = arith.constant dense<0.000000e+00> : vector<48x64xf32>
    %50 = tpu.matmul %48, %49, %cst_39 {dimension_numbers = #tpu.dot_dimension_numbers<[1], [0], [0], [1], [0, 0, 1, 1], [], []>} : vector<48x64xf32>, vector<64x64xf32>, vector<48x64xf32> -> vector<48x64xf32>
    %c0_40 = arith.constant 0 : index
    %c0_41 = arith.constant 0 : index
    %51 = vector.load %arg16[%c0_40, %c0_41] : memref<1x64xf32, #tpu.memory_space<vmem>>, vector<1x64xf32>
    %52 = vector.broadcast %51 : vector<1x64xf32> to vector<48x64xf32>
    %53 = arith.addf %50, %52 : vector<48x64xf32>
    %cst_42 = arith.constant 0.000000e+00 : f32
    %54 = vector.broadcast %cst_42 : f32 to vector<48x64xf32>
    %55 = arith.maximumf %53, %54 : vector<48x64xf32>
    %c0_43 = arith.constant 0 : index
    %c0_44 = arith.constant 0 : index
    %56 = vector.load %arg17[%c0_43, %c0_44] : memref<64x64xf32, #tpu.memory_space<vmem>>, vector<64x64xf32>
    %cst_45 = arith.constant dense<0.000000e+00> : vector<48x64xf32>
    %57 = tpu.matmul %55, %56, %cst_45 {dimension_numbers = #tpu.dot_dimension_numbers<[1], [0], [0], [1], [0, 0, 1, 1], [], []>} : vector<48x64xf32>, vector<64x64xf32>, vector<48x64xf32> -> vector<48x64xf32>
    %c0_46 = arith.constant 0 : index
    %c0_47 = arith.constant 0 : index
    %58 = vector.load %arg18[%c0_46, %c0_47] : memref<1x64xf32, #tpu.memory_space<vmem>>, vector<1x64xf32>
    %59 = vector.broadcast %58 : vector<1x64xf32> to vector<48x64xf32>
    %60 = arith.addf %57, %59 : vector<48x64xf32>
    %cst_48 = arith.constant 0.000000e+00 : f32
    %61 = vector.broadcast %cst_48 : f32 to vector<48x64xf32>
    %62 = arith.maximumf %60, %61 : vector<48x64xf32>
    %c0_49 = arith.constant 0 : index
    %c0_50 = arith.constant 0 : index
    %63 = vector.load %arg19[%c0_49, %c0_50] : memref<1x64xf32, #tpu.memory_space<vmem>>, vector<1x64xf32>
    %64 = vector.broadcast %63 : vector<1x64xf32> to vector<48x64xf32>
    %65 = arith.mulf %62, %64 : vector<48x64xf32>
    %cst_51 = arith.constant dense<0.000000e+00> : vector<48xf32>
    %66 = vector.multi_reduction <add>, %65, %cst_51 [1] : vector<48x64xf32> to vector<48xf32>
    %67 = vector.shape_cast %66 : vector<48xf32> to vector<48x1xf32>
    %c0_52 = arith.constant 0 : index
    %c0_53 = arith.constant 0 : index
    %68 = vector.load %arg20[%c0_52, %c0_53] : memref<1x1xf32, #tpu.memory_space<vmem>>, vector<1x1xf32>
    %69 = vector.broadcast %68 : vector<1x1xf32> to vector<48x1xf32>
    %70 = arith.addf %67, %69 : vector<48x1xf32>
    %71 = arith.subf %41, %0 : vector<48x32xf32>
    %72 = arith.mulf %71, %71 : vector<48x32xf32>
    %cst_54 = arith.constant dense<0.000000e+00> : vector<48xf32>
    %73 = vector.multi_reduction <add>, %72, %cst_54 [1] : vector<48x32xf32> to vector<48xf32>
    %74 = vector.shape_cast %73 : vector<48xf32> to vector<48x1xf32>
    %cst_55 = arith.constant 1.000000e+00 : f32
    %75 = vector.broadcast %cst_55 : f32 to vector<48x4xf32>
    %76 = arith.addf %75, %14 : vector<48x4xf32>
    %77 = arith.mulf %13, %13 : vector<48x4xf32>
    %78 = arith.subf %76, %77 : vector<48x4xf32>
    %79 = arith.mulf %17, %17 : vector<48x4xf32>
    %80 = arith.subf %78, %79 : vector<48x4xf32>
    %cst_56 = arith.constant dense<0.000000e+00> : vector<48xf32>
    %81 = vector.multi_reduction <add>, %80, %cst_56 [1] : vector<48x4xf32> to vector<48xf32>
    %82 = vector.shape_cast %81 : vector<48xf32> to vector<48x1xf32>
    %cst_57 = arith.constant -5.000000e-01 : f32
    %83 = vector.broadcast %cst_57 : f32 to vector<48x1xf32>
    %84 = arith.mulf %83, %82 : vector<48x1xf32>
    %85 = tpu.iota {dimensions = array<i32: 1>} : vector<1x8xi32>
    %cst_58 = arith.constant 0.000000e+00 : f32
    %86 = vector.broadcast %cst_58 : f32 to vector<48x4xf32>
    %87 = tpu.concatenate %20, %86 in 1 : vector<48x4xf32>, vector<48x4xf32> -> vector<48x8xf32>
    %c4_i32 = arith.constant 4 : i32
    %88 = vector.broadcast %c4_i32 : i32 to vector<1x8xi32>
    %89 = arith.cmpi eq, %85, %88 : vector<1x8xi32>
    %90 = arith.extui %89 : vector<1x8xi1> to vector<1x8xi32>
    %91 = arith.sitofp %90 : vector<1x8xi32> to vector<1x8xf32>
    %92 = vector.broadcast %70 : vector<48x1xf32> to vector<48x8xf32>
    %93 = vector.broadcast %91 : vector<1x8xf32> to vector<48x8xf32>
    %94 = arith.mulf %92, %93 : vector<48x8xf32>
    %95 = arith.addf %87, %94 : vector<48x8xf32>
    %c5_i32 = arith.constant 5 : i32
    %96 = vector.broadcast %c5_i32 : i32 to vector<1x8xi32>
    %97 = arith.cmpi eq, %85, %96 : vector<1x8xi32>
    %98 = arith.extui %97 : vector<1x8xi1> to vector<1x8xi32>
    %99 = arith.sitofp %98 : vector<1x8xi32> to vector<1x8xf32>
    %100 = vector.broadcast %74 : vector<48x1xf32> to vector<48x8xf32>
    %101 = vector.broadcast %99 : vector<1x8xf32> to vector<48x8xf32>
    %102 = arith.mulf %100, %101 : vector<48x8xf32>
    %103 = arith.addf %95, %102 : vector<48x8xf32>
    %c6_i32 = arith.constant 6 : i32
    %104 = vector.broadcast %c6_i32 : i32 to vector<1x8xi32>
    %105 = arith.cmpi eq, %85, %104 : vector<1x8xi32>
    %106 = arith.extui %105 : vector<1x8xi1> to vector<1x8xi32>
    %107 = arith.sitofp %106 : vector<1x8xi32> to vector<1x8xf32>
    %108 = vector.broadcast %84 : vector<48x1xf32> to vector<48x8xf32>
    %109 = vector.broadcast %107 : vector<1x8xf32> to vector<48x8xf32>
    %110 = arith.mulf %108, %109 : vector<48x8xf32>
    %111 = arith.addf %103, %110 : vector<48x8xf32>
    %c0_59 = arith.constant 0 : index
    %c0_60 = arith.constant 0 : index
    %112 = vector.load %arg21[%c0_59, %c0_60] : memref<48x8xf32, #tpu.memory_space<vmem>>, vector<48x8xf32>
    tpu.vector_store %arg21[%c0_59, %c0_60], %111 {strides = array<i32>} : memref<48x8xf32, #tpu.memory_space<vmem>>, vector<48x8xf32>,
    return
  }
  func.func @transform_0(%arg0: i32) -> (i32, i32) {
    %c0_i32 = arith.constant 0 : i32
    %c0_i32_0 = arith.constant 0 : i32
    return %arg0, %c0_i32 : i32, i32
  }
  func.func @transform_1(%arg0: i32) -> (i32, i32) {
    %c0_i32 = arith.constant 0 : i32
    %c0_i32_0 = arith.constant 0 : i32
    return %arg0, %c0_i32 : i32, i32
  }
  func.func @transform_2(%arg0: i32) -> (i32, i32) {
    %c0_i32 = arith.constant 0 : i32
    %c0_i32_0 = arith.constant 0 : i32
    %c0_i32_1 = arith.constant 0 : i32
    return %c0_i32, %c0_i32_0 : i32, i32
  }
  func.func @transform_3(%arg0: i32) -> (i32, i32) {
    %c0_i32 = arith.constant 0 : i32
    %c0_i32_0 = arith.constant 0 : i32
    %c0_i32_1 = arith.constant 0 : i32
    return %c0_i32, %c0_i32_0 : i32, i32
  }
  func.func @transform_4(%arg0: i32) -> (i32, i32) {
    %c0_i32 = arith.constant 0 : i32
    %c0_i32_0 = arith.constant 0 : i32
    %c0_i32_1 = arith.constant 0 : i32
    return %c0_i32, %c0_i32_0 : i32, i32
  }
  func.func @transform_5(%arg0: i32) -> (i32, i32) {
    %c0_i32 = arith.constant 0 : i32
    %c0_i32_0 = arith.constant 0 : i32
    %c0_i32_1 = arith.constant 0 : i32
    return %c0_i32, %c0_i32_0 : i32, i32
  }
  func.func @transform_6(%arg0: i32) -> (i32, i32) {
    %c0_i32 = arith.constant 0 : i32
    %c0_i32_0 = arith.constant 0 : i32
    %c0_i32_1 = arith.constant 0 : i32
    return %c0_i32, %c0_i32_0 : i32, i32
  }
  func.func @transform_7(%arg0: i32) -> (i32, i32) {
    %c0_i32 = arith.constant 0 : i32
    %c0_i32_0 = arith.constant 0 : i32
    %c0_i32_1 = arith.constant 0 : i32
    return %c0_i32, %c0_i32_0 : i32, i32
  }
  func.func @transform_8(%arg0: i32) -> (i32, i32) {
    %c0_i32 = arith.constant 0 : i32
    %c0_i32_0 = arith.constant 0 : i32
    %c0_i32_1 = arith.constant 0 : i32
    return %c0_i32, %c0_i32_0 : i32, i32
  }
  func.func @transform_9(%arg0: i32) -> (i32, i32) {
    %c0_i32 = arith.constant 0 : i32
    %c0_i32_0 = arith.constant 0 : i32
    %c0_i32_1 = arith.constant 0 : i32
    return %c0_i32, %c0_i32_0 : i32, i32
  }
  func.func @transform_10(%arg0: i32) -> (i32, i32) {
    %c0_i32 = arith.constant 0 : i32
    %c0_i32_0 = arith.constant 0 : i32
    %c0_i32_1 = arith.constant 0 : i32
    return %c0_i32, %c0_i32_0 : i32, i32
  }
  func.func @transform_11(%arg0: i32) -> (i32, i32) {
    %c0_i32 = arith.constant 0 : i32
    %c0_i32_0 = arith.constant 0 : i32
    %c0_i32_1 = arith.constant 0 : i32
    return %c0_i32, %c0_i32_0 : i32, i32
  }
  func.func @transform_12(%arg0: i32) -> (i32, i32) {
    %c0_i32 = arith.constant 0 : i32
    %c0_i32_0 = arith.constant 0 : i32
    %c0_i32_1 = arith.constant 0 : i32
    return %c0_i32, %c0_i32_0 : i32, i32
  }
  func.func @transform_13(%arg0: i32) -> (i32, i32) {
    %c0_i32 = arith.constant 0 : i32
    %c0_i32_0 = arith.constant 0 : i32
    %c0_i32_1 = arith.constant 0 : i32
    return %c0_i32, %c0_i32_0 : i32, i32
  }
  func.func @transform_14(%arg0: i32) -> (i32, i32) {
    %c0_i32 = arith.constant 0 : i32
    %c0_i32_0 = arith.constant 0 : i32
    %c0_i32_1 = arith.constant 0 : i32
    return %c0_i32, %c0_i32_0 : i32, i32
  }
  func.func @transform_15(%arg0: i32) -> (i32, i32) {
    %c0_i32 = arith.constant 0 : i32
    %c0_i32_0 = arith.constant 0 : i32
    %c0_i32_1 = arith.constant 0 : i32
    return %c0_i32, %c0_i32_0 : i32, i32
  }
  func.func @transform_16(%arg0: i32) -> (i32, i32) {
    %c0_i32 = arith.constant 0 : i32
    %c0_i32_0 = arith.constant 0 : i32
    %c0_i32_1 = arith.constant 0 : i32
    return %c0_i32, %c0_i32_0 : i32, i32
  }
  func.func @transform_17(%arg0: i32) -> (i32, i32) {
    %c0_i32 = arith.constant 0 : i32
    %c0_i32_0 = arith.constant 0 : i32
    %c0_i32_1 = arith.constant 0 : i32
    return %c0_i32, %c0_i32_0 : i32, i32
  }
  func.func @transform_18(%arg0: i32) -> (i32, i32) {
    %c0_i32 = arith.constant 0 : i32
    %c0_i32_0 = arith.constant 0 : i32
    %c0_i32_1 = arith.constant 0 : i32
    return %c0_i32, %c0_i32_0 : i32, i32
  }
  func.func @transform_19(%arg0: i32) -> (i32, i32) {
    %c0_i32 = arith.constant 0 : i32
    %c0_i32_0 = arith.constant 0 : i32
    %c0_i32_1 = arith.constant 0 : i32
    return %c0_i32, %c0_i32_0 : i32, i32
  }
  func.func @transform_20(%arg0: i32) -> (i32, i32) {
    %c0_i32 = arith.constant 0 : i32
    %c0_i32_0 = arith.constant 0 : i32
    return %arg0, %c0_i32 : i32, i32
  }
}

</mosaic_0001>

<llo_original>
// kernel: _forward_impl.1
$region0: #{_forward_impl.1}
  #allocation0 [shape = 'u32[]', space=smem, size = 0x4, offset = 0x4, fixed_abs, tag = 'smem constant byte address 0x4 - core index']
  #allocation1 [shape = 'u32[144,128]{1,0:T(1,128)}', space=vmem, size = 0x12000, scoped, tag = 'internal scratch']
  #allocation2 [shape = 'f32[1,1]{1,0:T(1,128)S(1)}', space=vmem, size = 0x200, scoped, tag = 'scoped memory for _forward_impl.1']
  %s0 = inlined_call_operand.hbm [shape: f32[48,32], index: 0, kind: input, shape index: {}]
  %s1 = inlined_call_operand.vmem [shape: f32[48,4], index: 1, kind: input, shape index: {}]
  %s2 = inlined_call_operand.vmem [shape: f32[32,256], index: 2, kind: input, shape index: {}]
  %s3 = inlined_call_operand.hbm [shape: f32[1,256], index: 3, kind: input, shape index: {}]
  %s4 = inlined_call_operand.vmem [shape: f32[256,8], index: 4, kind: input, shape index: {}]
  %s5 = inlined_call_operand.hbm [shape: f32[1,8], index: 5, kind: input, shape index: {}]
  %s6 = inlined_call_operand.vmem [shape: f32[4,320], index: 6, kind: input, shape index: {}]
  %s7 = inlined_call_operand.vmem [shape: f32[1,320], index: 7, kind: input, shape index: {}]
  %s8 = inlined_call_operand.vmem [shape: f32[256,256], index: 8, kind: input, shape index: {}]
  %s9 = inlined_call_operand.hbm [shape: f32[1,256], index: 9, kind: input, shape index: {}]
  %s10 = inlined_call_operand.vmem [shape: f32[256,32], index: 10, kind: input, shape index: {}]
  %s11 = inlined_call_operand.hbm [shape: f32[1,32], index: 11, kind: input, shape index: {}]
  %s12 = inlined_call_operand.vmem [shape: f32[64,64], index: 12, kind: input, shape index: {}]
  %s13 = inlined_call_operand.hbm [shape: f32[1,64], index: 13, kind: input, shape index: {}]
  %s14 = inlined_call_operand.hbm [shape: f32[64,64], index: 14, kind: input, shape index: {}]
  %s15 = inlined_call_operand.hbm [shape: f32[1,64], index: 15, kind: input, shape index: {}]
  %s16 = inlined_call_operand.vmem [shape: f32[64,64], index: 16, kind: input, shape index: {}]
  %s17 = inlined_call_operand.hbm [shape: f32[1,64], index: 17, kind: input, shape index: {}]
  %s18 = inlined_call_operand.vmem [shape: f32[1,64], index: 18, kind: input, shape index: {}]
  %s19 = inlined_call_operand.<no memory space> [shape: f32[1,1], index: 19, kind: input, shape index: {}]
  %s20 = inlined_call_operand.vmem [shape: f32[48,8], index: 20, kind: output, shape index: {}]
  %s21 = sld [smem:[#allocation0]]
  $region126: #{_forward_impl.1} parent=0
    _
  %s23 = ssub.s32 1, %s21
  %s24 = scalar_select 0, %s23, %s21
  %v25 = vstv %s19
  %26 = vst [vmem:[#allocation2] sm:$0x1] %v25
  $region1: #{_forward_impl.1} parent=0
    #allocation3 [shape = 'u8[24576]{0}', space=vmem, size = 0x6000, scoped, tag = 'input window, operand 0, single buffered']
    #allocation4 [shape = 's32[1]{0}', space=sflag, size = 0x4, scoped, tag = 'scoped memory for _forward_impl.1']
    #allocation5 [shape = 'u8[1024]{0}', space=vmem, size = 0x400, scoped, tag = 'input window, operand 3, single buffered']
    #allocation6 [shape = 's32[1]{0}', space=sflag, size = 0x4, scoped, tag = 'scoped memory for _forward_impl.1']
    #allocation7 [shape = 'u8[512]{0}', space=vmem, size = 0x400, scoped, tag = 'input window, operand 5, single buffered']
    #allocation8 [shape = 'u8[1024]{0}', space=vmem, size = 0x400, scoped, tag = 'input window, operand 9, single buffered']
    #allocation9 [shape = 's32[1]{0}', space=sflag, size = 0x4, scoped, tag = 'scoped memory for _forward_impl.1']
    #allocation10 [shape = 'u8[512]{0}', space=vmem, size = 0x400, scoped, tag = 'input window, operand 11, single buffered']
    #allocation11 [shape = 'u8[512]{0}', space=vmem, size = 0x400, scoped, tag = 'input window, operand 13, single buffered']
    #allocation12 [shape = 's32[1]{0}', space=sflag, size = 0x4, scoped, tag = 'scoped memory for _forward_impl.1']
    #allocation13 [shape = 'u8[32768]{0}', space=vmem, size = 0x8000, scoped, tag = 'input window, operand 14, single buffered']
    #allocation14 [shape = 'u8[512]{0}', space=vmem, size = 0x400, scoped, tag = 'input window, operand 15, single buffered']
    #allocation15 [shape = 's32[1]{0}', space=sflag, size = 0x4, scoped, tag = 'scoped memory for _forward_impl.1']
    #allocation16 [shape = 'u8[512]{0}', space=vmem, size = 0x400, scoped, tag = 'input window, operand 17, single buffered']
    %27 = vsyncpa [#allocation4], 0
    %28 = vsyncpa [#allocation6], 0
    %29 = vsyncpa [#allocation9], 0
    %30 = vsyncpa [#allocation12], 0
    %31 = vsyncpa [#allocation15], 0
    // Predicated region
    $region2: #{_forward_impl.1} parent=1 // pred_check
      _
    $region3: #{_forward_impl.1} parent=1 // pred_check_branch
      %33 = sbr.rel (0) target = $region5
    $region4: #{_forward_impl.1} parent=1 // pred_region
      %s35 = ssub.s32 768, 768
      %36 = vsyncadd [#allocation4], %s35
      %s37 = sshll.u32 [#allocation3], 4
      %s38 = int_to_ptr.vmem [resolvable:$true] %s37
      %43 = dma.hbm_to_vmem [thread:$0]  %s0, 768, %s38, [#allocation4], 128, 128, 8
    $region5: #{_forward_impl.1} parent=1 // pred_fallthru
      _
    // Predicated region
    $region6: #{_forward_impl.1} parent=1 // pred_check
      _
    $region7: #{_forward_impl.1} parent=1 // pred_check_branch
      %45 = sbr.rel (0) target = $region9
    $region8: #{_forward_impl.1} parent=1 // pred_region
      _
    $region9: #{_forward_impl.1} parent=1 // pred_fallthru
      _
    // Predicated region
    $region10: #{_forward_impl.1} parent=1 // pred_check
      _
    $region11: #{_forward_impl.1} parent=1 // pred_check_branch
      %47 = sbr.rel (0) target = $region13
    $region12: #{_forward_impl.1} parent=1 // pred_region
      _
    $region13: #{_forward_impl.1} parent=1 // pred_fallthru
      _
    // Predicated region
    $region14: #{_forward_impl.1} parent=1 // pred_check
      _
    $region15: #{_forward_impl.1} parent=1 // pred_check_branch
      %49 = sbr.rel (0) target = $region17
    $region16: #{_forward_impl.1} parent=1 // pred_region
      %s51 = ssub.s32 32, 32
      %52 = vsyncadd [#allocation6], %s51
      %s54 = sshll.u32 [#allocation5], 4
      %s55 = int_to_ptr.vmem [resolvable:$true] %s54
      %57 = dma.hbm_to_vmem [thread:$0]  %s3, 32, %s55, [#allocation6]
    $region17: #{_forward_impl.1} parent=1 // pred_fallthru
      _
    // Predicated region
    $region18: #{_forward_impl.1} parent=1 // pred_check
      _
    $region19: #{_forward_impl.1} parent=1 // pred_check_branch
      %59 = sbr.rel (0) target = $region21
    $region20: #{_forward_impl.1} parent=1 // pred_region
      _
    $region21: #{_forward_impl.1} parent=1 // pred_fallthru
      _
    // Predicated region
    $region22: #{_forward_impl.1} parent=1 // pred_check
      _
    $region23: #{_forward_impl.1} parent=1 // pred_check_branch
      %61 = sbr.rel (0) target = $region25
    $region24: #{_forward_impl.1} parent=1 // pred_region
      %s63 = ssub.s32 16, 16
      %64 = vsyncadd [#allocation6], %s63
      %s66 = sshll.u32 [#allocation7], 4
      %s67 = int_to_ptr.vmem [resolvable:$true] %s66
      %69 = dma.hbm_to_vmem [thread:$0]  %s5, 16, %s67, [#allocation6]
    $region25: #{_forward_impl.1} parent=1 // pred_fallthru
      _
    // Predicated region
    $region26: #{_forward_impl.1} parent=1 // pred_check
      _
    $region27: #{_forward_impl.1} parent=1 // pred_check_branch
      %71 = sbr.rel (0) target = $region29
    $region28: #{_forward_impl.1} parent=1 // pred_region
      _
    $region29: #{_forward_impl.1} parent=1 // pred_fallthru
      _
    // Predicated region
    $region30: #{_forward_impl.1} parent=1 // pred_check
      _
    $region31: #{_forward_impl.1} parent=1 // pred_check_branch
      %73 = sbr.rel (0) target = $region33
    $region32: #{_forward_impl.1} parent=1 // pred_region
      _
    $region33: #{_forward_impl.1} parent=1 // pred_fallthru
      _
    // Predicated region
    $region34: #{_forward_impl.1} parent=1 // pred_check
      _
    $region35: #{_forward_impl.1} parent=1 // pred_check_branch
      %75 = sbr.rel (0) target = $region37
    $region36: #{_forward_impl.1} parent=1 // pred_region
      _
    $region37: #{_forward_impl.1} parent=1 // pred_fallthru
      _
    // Predicated region
    $region38: #{_forward_impl.1} parent=1 // pred_check
      _
    $region39: #{_forward_impl.1} parent=1 // pred_check_branch
      %77 = sbr.rel (0) target = $region41
    $region40: #{_forward_impl.1} parent=1 // pred_region
      %s79 = ssub.s32 32, 32
      %80 = vsyncadd [#allocation9], %s79
      %s82 = sshll.u32 [#allocation8], 4
      %s83 = int_to_ptr.vmem [resolvable:$true] %s82
      %85 = dma.hbm_to_vmem [thread:$0]  %s9, 32, %s83, [#allocation9]
    $region41: #{_forward_impl.1} parent=1 // pred_fallthru
      _
    // Predicated region
    $region42: #{_forward_impl.1} parent=1 // pred_check
      _
    $region43: #{_forward_impl.1} parent=1 // pred_check_branch
      %87 = sbr.rel (0) target = $region45
    $region44: #{_forward_impl.1} parent=1 // pred_region
      _
    $region45: #{_forward_impl.1} parent=1 // pred_fallthru
      _
    // Predicated region
    $region46: #{_forward_impl.1} parent=1 // pred_check
      _
    $region47: #{_forward_impl.1} parent=1 // pred_check_branch
      %89 = sbr.rel (0) target = $region49
    $region48: #{_forward_impl.1} parent=1 // pred_region
      %s91 = ssub.s32 16, 16
      %92 = vsyncadd [#allocation9], %s91
      %s94 = sshll.u32 [#allocation10], 4
      %s95 = int_to_ptr.vmem [resolvable:$true] %s94
      %97 = dma.hbm_to_vmem [thread:$0]  %s11, 16, %s95, [#allocation9]
    $region49: #{_forward_impl.1} parent=1 // pred_fallthru
      _
    // Predicated region
    $region50: #{_forward_impl.1} parent=1 // pred_check
      _
    $region51: #{_forward_impl.1} parent=1 // pred_check_branch
      %99 = sbr.rel (0) target = $region53
    $region52: #{_forward_impl.1} parent=1 // pred_region
      _
    $region53: #{_forward_impl.1} parent=1 // pred_fallthru
      _
    // Predicated region
    $region54: #{_forward_impl.1} parent=1 // pred_check
      _
    $region55: #{_forward_impl.1} parent=1 // pred_check_branch
      %101 = sbr.rel (0) target = $region57
    $region56: #{_forward_impl.1} parent=1 // pred_region
      %s103 = ssub.s32 16, 16
      %104 = vsyncadd [#allocation12], %s103
      %s106 = sshll.u32 [#allocation11], 4
      %s107 = int_to_ptr.vmem [resolvable:$true] %s106
      %109 = dma.hbm_to_vmem [thread:$0]  %s13, 16, %s107, [#allocation12]
    $region57: #{_forward_impl.1} parent=1 // pred_fallthru
      _
    // Predicated region
    $region58: #{_forward_impl.1} parent=1 // pred_check
      _
    $region59: #{_forward_impl.1} parent=1 // pred_check_branch
      %111 = sbr.rel (0) target = $region61
    $region60: #{_forward_impl.1} parent=1 // pred_region
      %s113 = ssub.s32 1024, 1024
      %114 = vsyncadd [#allocation12], %s113
      %s115 = sshll.u32 [#allocation13], 4
      %s116 = int_to_ptr.vmem [resolvable:$true] %s115
      %121 = dma.hbm_to_vmem [thread:$0]  %s14, 1024, %s116, [#allocation12], 128, 128, 8
    $region61: #{_forward_impl.1} parent=1 // pred_fallthru
      _
    // Predicated region
    $region62: #{_forward_impl.1} parent=1 // pred_check
      _
    $region63: #{_forward_impl.1} parent=1 // pred_check_branch
      %123 = sbr.rel (0) target = $region65
    $region64: #{_forward_impl.1} parent=1 // pred_region
      %s125 = ssub.s32 16, 16
      %126 = vsyncadd [#allocation15], %s125
      %s128 = sshll.u32 [#allocation14], 4
      %s129 = int_to_ptr.vmem [resolvable:$true] %s128
      %131 = dma.hbm_to_vmem [thread:$0]  %s15, 16, %s129, [#allocation15]
    $region65: #{_forward_impl.1} parent=1 // pred_fallthru
      _
    // Predicated region
    $region66: #{_forward_impl.1} parent=1 // pred_check
      _
    $region67: #{_forward_impl.1} parent=1 // pred_check_branch
      %133 = sbr.rel (0) target = $region69
    $region68: #{_forward_impl.1} parent=1 // pred_region
      _
    $region69: #{_forward_impl.1} parent=1 // pred_fallthru
      _
    // Predicated region
    $region70: #{_forward_impl.1} parent=1 // pred_check
      _
    $region71: #{_forward_impl.1} parent=1 // pred_check_branch
      %135 = sbr.rel (0) target = $region73
    $region72: #{_forward_impl.1} parent=1 // pred_region
      %s137 = ssub.s32 16, 16
      %138 = vsyncadd [#allocation15], %s137
      %s140 = sshll.u32 [#allocation16], 4
      %s141 = int_to_ptr.vmem [resolvable:$true] %s140
      %143 = dma.hbm_to_vmem [thread:$0]  %s17, 16, %s141, [#allocation15]
    $region73: #{_forward_impl.1} parent=1 // pred_fallthru
      _
    // Predicated region
    $region74: #{_forward_impl.1} parent=1 // pred_check
      _
    $region75: #{_forward_impl.1} parent=1 // pred_check_branch
      %145 = sbr.rel (0) target = $region77
    $region76: #{_forward_impl.1} parent=1 // pred_region
      _
    $region77: #{_forward_impl.1} parent=1 // pred_fallthru
      _
    // Predicated region
    $region78: #{_forward_impl.1} parent=1 // pred_check
      _
    $region79: #{_forward_impl.1} parent=1 // pred_check_branch
      %147 = sbr.rel (0) target = $region81
    $region80: #{_forward_impl.1} parent=1 // pred_region
      _
    $region81: #{_forward_impl.1} parent=1 // pred_fallthru
      _
    // Predicated region
    $region82: #{_forward_impl.1} parent=1 // pred_check
      _
    $region83: #{_forward_impl.1} parent=1 // pred_check_branch
      %149 = sbr.rel (0) target = $region85
    $region84: #{_forward_impl.1} parent=1 // pred_region
      %150 = dma.done [#allocation4], 768
    $region85: #{_forward_impl.1} parent=1 // pred_fallthru
      _
    // Predicated region
    $region86: #{_forward_impl.1} parent=1 // pred_check
      _
    $region87: #{_forward_impl.1} parent=1 // pred_check_branch
      %152 = sbr.rel (0) target = $region89
    $region88: #{_forward_impl.1} parent=1 // pred_region
      %153 = dma.done [#allocation6], 32
    $region89: #{_forward_impl.1} parent=1 // pred_fallthru
      _
    // Predicated region
    $region90: #{_forward_impl.1} parent=1 // pred_check
      _
    $region91: #{_forward_impl.1} parent=1 // pred_check_branch
      %155 = sbr.rel (0) target = $region93
    $region92: #{_forward_impl.1} parent=1 // pred_region
      %156 = dma.done [#allocation6], 16
    $region93: #{_forward_impl.1} parent=1 // pred_fallthru
      _
    // Predicated region
    $region94: #{_forward_impl.1} parent=1 // pred_check
      _
    $region95: #{_forward_impl.1} parent=1 // pred_check_branch
      %158 = sbr.rel (0) target = $region97
    $region96: #{_forward_impl.1} parent=1 // pred_region
      %159 = dma.done [#allocation9], 32
    $region97: #{_forward_impl.1} parent=1 // pred_fallthru
      _
    // Predicated region
    $region98: #{_forward_impl.1} parent=1 // pred_check
      _
    $region99: #{_forward_impl.1} parent=1 // pred_check_branch
      %161 = sbr.rel (0) target = $region101
    $region100: #{_forward_impl.1} parent=1 // pred_region
      %162 = dma.done [#allocation9], 16
    $region101: #{_forward_impl.1} parent=1 // pred_fallthru
      _
    // Predicated region
    $region102: #{_forward_impl.1} parent=1 // pred_check
      _
    $region103: #{_forward_impl.1} parent=1 // pred_check_branch
      %164 = sbr.rel (0) target = $region105
    $region104: #{_forward_impl.1} parent=1 // pred_region
      %165 = dma.done [#allocation12], 16
    $region105: #{_forward_impl.1} parent=1 // pred_fallthru
      _
    // Predicated region
    $region106: #{_forward_impl.1} parent=1 // pred_check
      _
    $region107: #{_forward_impl.1} parent=1 // pred_check_branch
      %167 = sbr.rel (0) target = $region109
    $region108: #{_forward_impl.1} parent=1 // pred_region
      %168 = dma.done [#allocation12], 1024
    $region109: #{_forward_impl.1} parent=1 // pred_fallthru
      _
    // Predicated region
    $region110: #{_forward_impl.1} parent=1 // pred_check
      _
    $region111: #{_forward_impl.1} parent=1 // pred_check_branch
      %170 = sbr.rel (0) target = $region113
    $region112: #{_forward_impl.1} parent=1 // pred_region
      %171 = dma.done [#allocation15], 16
    $region113: #{_forward_impl.1} parent=1 // pred_fallthru
      _
    // Predicated region
    $region114: #{_forward_impl.1} parent=1 // pred_check
      _
    $region115: #{_forward_impl.1} parent=1 // pred_check_branch
      %173 = sbr.rel (0) target = $region117
    $region116: #{_forward_impl.1} parent=1 // pred_region
      %174 = dma.done [#allocation15], 16
    $region117: #{_forward_impl.1} parent=1 // pred_fallthru
      _
    %v175 = vld [vmem:[#allocation3] sm:$0xff]
    %v176 = vld [vmem:[#allocation3 + $0x8] sm:$0xff]
    %v177 = vld [vmem:[#allocation3 + $0x10] sm:$0xff]
    %v178 = vld [vmem:[#allocation3 + $0x18] sm:$0xff]
    %v179 = vld [vmem:[#allocation3 + $0x20] sm:$0xff]
    %v180 = vld [vmem:[#allocation3 + $0x28] sm:$0xff]
    %v181 = vld [vmem:[%s2] sm:$0xff]
    %v182 = vld [vmem:[%s2 + $0x8] sm:$0xff]
    %v183 = vld [vmem:[%s2 + $0x10] sm:$0xff]
    %v184 = vld [vmem:[%s2 + $0x18] sm:$0xff]
    %v185 = vld [vmem:[%s2 + $0x20] sm:$0xff]
    %v186 = vld [vmem:[%s2 + $0x28] sm:$0xff]
    %v187 = vld [vmem:[%s2 + $0x30] sm:$0xff]
    %v188 = vld [vmem:[%s2 + $0x38] sm:$0xff]
    %v189 = vld [vmem:[#allocation5] sm:$0x3]
    %v191 = vlaneseq
    %v192 = vshrl.u32 %v191, 7
    %v193 = vsub.s32 0, %v192
    %v194 = vrot.slane %v189, %v193
    %v195 = vlaneseq
    %v196 = vshrl.u32 %v195, 7
    %v197 = vsub.s32 1, %v196
    %v198 = vrot.slane %v189, %v197
    %vm201 = vcmask 261120
    %v203 = vsel %vm201, %v175, 0
    %v206 = vsel %vm201, %v176, 0
    %v209 = vsel %vm201, %v177, 0
    %v212 = vsel %vm201, %v178, 0
    %v215 = vsel %vm201, %v179, 0
    %v218 = vsel %vm201, %v180, 0
    %220 = vmatprep.subr.mxu0 %v182
    %221 = vmatpush1.msra.mxu0 %v181
    %222 = vmatprep.subr.mxu0 %v184
    %223 = vmatpush1.msra.mxu0 %v183
    %224 = vmatprep.subr.mxu0 %v186
    %225 = vmatpush1.msra.mxu0 %v185
    %226 = vmatprep.subr.mxu0 %v188
    %227 = vmatpush1.msra.mxu0 %v187
    %228 = vmatprep.subr.mxu0 0.0
    %229 = vmatpush1.msra.mxu0 0.0
    %230 = vmatprep.subr.mxu0 0.0
    %231 = vmatpush1.msra.mxu0 0.0
    %232 = vmatprep.subr.mxu0 0.0
    %233 = vmatpush1.msra.mxu0 0.0
    %234 = vmatprep.subr.mxu0 0.0
    %235 = vmatpush1.msra.mxu0 0.0
    %236 = vmatprep.subr.mxu0 0.0
    %237 = vmatpush1.msra.mxu0 0.0
    %238 = vmatprep.subr.mxu0 0.0
    %239 = vmatpush1.msra.mxu0 0.0
    %240 = vmatprep.subr.mxu0 0.0
    %241 = vmatpush1.msra.mxu0 0.0
    %242 = vmatprep.subr.mxu0 0.0
    %243 = vmatpush1.msra.mxu0 0.0
    %244 = vmatprep.subr.mxu0 0.0
    %245 = vmatpush1.msra.mxu0 0.0
    %246 = vmatprep.subr.mxu0 0.0
    %247 = vmatpush1.msra.mxu0 0.0
    %248 = vmatprep.subr.mxu0 0.0
    %249 = vmatpush1.msra.mxu0 0.0
    %250 = vmatprep.subr.mxu0 0.0
    %251 = vmatpush1.msra.mxu0 0.0
    %252 = vmatprep.subr.mxu0 0.0
    %253 = vmatpush1.msra.mxu0 0.0
    %254 = vmatprep.subr.mxu0 0.0
    %255 = vmatpush1.msra.mxu0 0.0
    %256 = vmatprep.subr.mxu0 0.0
    %257 = vmatpush1.msra.mxu0 0.0
    %258 = vmatprep.subr.mxu0 0.0
    %259 = vmatpush1.msra.mxu0 0.0
    %260 = vmatprep.subr.mxu0 0.0
    %261 = vmatpush1.msra.mxu0 0.0
    %262 = vmatprep.subr.mxu0 0.0
    %263 = vmatpush1.msra.mxu0 0.0
    %264 = vmatprep.subr.mxu0 0.0
    %265 = vmatpush1.msra.mxu0 0.0
    %266 = vmatprep.subr.mxu0 0.0
    %267 = vmatpush1.msra.mxu0 0.0
    %268 = vmatprep.subr.mxu0 0.0
    %269 = vmatpush1.msra.mxu0 0.0
    %270 = vmatprep.subr.mxu0 0.0
    %271 = vmatpush1.msra.mxu0 0.0
    %272 = vmatprep.subr.mxu0 0.0
    %273 = vmatpush1.msra.mxu0 0.0
    %274 = vmatprep.subr.mxu0 0.0
    %275 = vmatpush1.msra.mxu0 0.0
    %276 = vmatprep.subr.mxu0 0.0
    %277 = vmatpush1.msra.mxu0 0.0
    %278 = vmatprep.subr.mxu0 0.0
    %279 = vmatpush1.msra.mxu0 0.0
    %280 = vmatprep.subr.mxu0 0.0
    %281 = vmatpush1.msra.mxu0 0.0
    %282 = vmatprep.subr.mxu0 0.0
    %283 = vmatpush1.msra.mxu0 0.0
    %284 = vmatprep.mubr.f32.mxu0 0.0
    %285 = vmatmul.mubr.f32.gmra.mrb[0].mxu0 %v203
    %v286 = vpop.f32.mrb[0].mxu0
    %v287 = vadd.f32 %v194, %v286
    %v288 = vpop.f32.mrb[0].mxu0
    %v289 = vadd.f32 %v198, %v288
    %290 = vmatprep.mubr.f32.mxu0 0.0
    %291 = vmatmul.mubr.f32.gmra.mrb[0].mxu0 %v206
    %v292 = vpop.f32.mrb[0].mxu0
    %v293 = vadd.f32 %v194, %v292
    %v294 = vpop.f32.mrb[0].mxu0
    %v295 = vadd.f32 %v198, %v294
    %296 = vmatprep.mubr.f32.mxu0 0.0
    %297 = vmatmul.mubr.f32.gmra.mrb[0].mxu0 %v209
    %v298 = vpop.f32.mrb[0].mxu0
    %v299 = vadd.f32 %v194, %v298
    %v300 = vpop.f32.mrb[0].mxu0
    %v301 = vadd.f32 %v198, %v300
    %302 = vmatprep.mubr.f32.mxu0 0.0
    %303 = vmatmul.mubr.f32.gmra.mrb[0].mxu0 %v212
    %v304 = vpop.f32.mrb[0].mxu0
    %v305 = vadd.f32 %v194, %v304
    %v306 = vpop.f32.mrb[0].mxu0
    %v307 = vadd.f32 %v198, %v306
    %308 = vmatprep.mubr.f32.mxu0 0.0
    %309 = vmatmul.mubr.f32.gmra.mrb[0].mxu0 %v215
    %v310 = vpop.f32.mrb[0].mxu0
    %v311 = vadd.f32 %v194, %v310
    %v312 = vpop.f32.mrb[0].mxu0
    %v313 = vadd.f32 %v198, %v312
    %314 = vmatprep.mubr.f32.mxu0 0.0
    %315 = vmatmul.mubr.f32.gmra.mrb[0].mxu0 %v218
    %v316 = vpop.f32.mrb[0].mxu0
    %v317 = vadd.f32 %v194, %v316
    %v318 = vpop.f32.mrb[0].mxu0
    %v319 = vadd.f32 %v198, %v318
    %320 = vdwg.mxu0
    %v321 = vmax.f32 %v287, 0.0
    %v322 = vmax.f32 %v289, 0.0
    %v323 = vmax.f32 %v293, 0.0
    %v324 = vmax.f32 %v295, 0.0
    %v325 = vmax.f32 %v299, 0.0
    %v326 = vmax.f32 %v301, 0.0
    %v327 = vmax.f32 %v305, 0.0
    %v328 = vmax.f32 %v307, 0.0
    %v329 = vmax.f32 %v311, 0.0
    %v330 = vmax.f32 %v313, 0.0
    %v331 = vmax.f32 %v317, 0.0
    %v332 = vmax.f32 %v319, 0.0
    %v333 = vld [vmem:[%s4] sm:$0xff]
    %v334 = vld [vmem:[%s4 + $0x8] sm:$0xff]
    %v335 = vld [vmem:[%s4 + $0x10] sm:$0xff]
    %v336 = vld [vmem:[%s4 + $0x18] sm:$0xff]
    %v337 = vld [vmem:[%s4 + $0x20] sm:$0xff]
    %v338 = vld [vmem:[%s4 + $0x28] sm:$0xff]
    %v339 = vld [vmem:[%s4 + $0x30] sm:$0xff]
    %v340 = vld [vmem:[%s4 + $0x38] sm:$0xff]
    %v341 = vld [vmem:[%s4 + $0x40] sm:$0xff]
    %v342 = vld [vmem:[%s4 + $0x48] sm:$0xff]
    %v343 = vld [vmem:[%s4 + $0x50] sm:$0xff]
    %v344 = vld [vmem:[%s4 + $0x58] sm:$0xff]
    %v345 = vld [vmem:[%s4 + $0x60] sm:$0xff]
    %v346 = vld [vmem:[%s4 + $0x68] sm:$0xff]
    %v347 = vld [vmem:[%s4 + $0x70] sm:$0xff]
    %v348 = vld [vmem:[%s4 + $0x78] sm:$0xff]
    %v349 = vld [vmem:[%s4 + $0x80] sm:$0xff]
    %v350 = vld [vmem:[%s4 + $0x88] sm:$0xff]
    %v351 = vld [vmem:[%s4 + $0x90] sm:$0xff]
    %v352 = vld [vmem:[%s4 + $0x98] sm:$0xff]
    %v353 = vld [vmem:[%s4 + $0xa0] sm:$0xff]
    %v354 = vld [vmem:[%s4 + $0xa8] sm:$0xff]
    %v355 = vld [vmem:[%s4 + $0xb0] sm:$0xff]
    %v356 = vld [vmem:[%s4 + $0xb8] sm:$0xff]
    %v357 = vld [vmem:[%s4 + $0xc0] sm:$0xff]
    %v358 = vld [vmem:[%s4 + $0xc8] sm:$0xff]
    %v359 = vld [vmem:[%s4 + $0xd0] sm:$0xff]
    %v360 = vld [vmem:[%s4 + $0xd8] sm:$0xff]
    %v361 = vld [vmem:[%s4 + $0xe0] sm:$0xff]
    %v362 = vld [vmem:[%s4 + $0xe8] sm:$0xff]
    %v363 = vld [vmem:[%s4 + $0xf0] sm:$0xff]
    %v364 = vld [vmem:[%s4 + $0xf8] sm:$0xff]
    %v365 = vld [vmem:[#allocation7] sm:$0x1]
    %v367 = vlaneseq
    %v368 = vshrl.u32 %v367, 7
    %v369 = vsub.s32 0, %v368
    %v370 = vrot.slane %v365, %v369
    %372 = vmatprep.subr.mxu0 0.0
    %373 = vmatpush1.msra.mxu0 %v333
    %374 = vmatprep.subr.mxu0 0.0
    %375 = vmatpush1.msra.mxu0 %v334
    %376 = vmatprep.subr.mxu0 0.0
    %377 = vmatpush1.msra.mxu0 %v335
    %378 = vmatprep.subr.mxu0 0.0
    %379 = vmatpush1.msra.mxu0 %v336
    %380 = vmatprep.subr.mxu0 0.0
    %381 = vmatpush1.msra.mxu0 %v337
    %382 = vmatprep.subr.mxu0 0.0
    %383 = vmatpush1.msra.mxu0 %v338
    %384 = vmatprep.subr.mxu0 0.0
    %385 = vmatpush1.msra.mxu0 %v339
    %386 = vmatprep.subr.mxu0 0.0
    %387 = vmatpush1.msra.mxu0 %v340
    %388 = vmatprep.subr.mxu0 0.0
    %389 = vmatpush1.msra.mxu0 %v341
    %390 = vmatprep.subr.mxu0 0.0
    %391 = vmatpush1.msra.mxu0 %v342
    %392 = vmatprep.subr.mxu0 0.0
    %393 = vmatpush1.msra.mxu0 %v343
    %394 = vmatprep.subr.mxu0 0.0
    %395 = vmatpush1.msra.mxu0 %v344
    %396 = vmatprep.subr.mxu0 0.0
    %397 = vmatpush1.msra.mxu0 %v345
    %398 = vmatprep.subr.mxu0 0.0
    %399 = vmatpush1.msra.mxu0 %v346
    %400 = vmatprep.subr.mxu0 0.0
    %401 = vmatpush1.msra.mxu0 %v347
    %402 = vmatprep.subr.mxu0 0.0
    %403 = vmatpush1.msra.mxu0 %v348
    %404 = vmatprep.subr.mxu0 0.0
    %405 = vmatpush1.msra.mxu0 %v349
    %406 = vmatprep.subr.mxu0 0.0
    %407 = vmatpush1.msra.mxu0 %v350
    %408 = vmatprep.subr.mxu0 0.0
    %409 = vmatpush1.msra.mxu0 %v351
    %410 = vmatprep.subr.mxu0 0.0
    %411 = vmatpush1.msra.mxu0 %v352
    %412 = vmatprep.subr.mxu0 0.0
    %413 = vmatpush1.msra.mxu0 %v353
    %414 = vmatprep.subr.mxu0 0.0
    %415 = vmatpush1.msra.mxu0 %v354
    %416 = vmatprep.subr.mxu0 0.0
    %417 = vmatpush1.msra.mxu0 %v355
    %418 = vmatprep.subr.mxu0 0.0
    %419 = vmatpush1.msra.mxu0 %v356
    %420 = vmatprep.subr.mxu0 0.0
    %421 = vmatpush1.msra.mxu0 %v357
    %422 = vmatprep.subr.mxu0 0.0
    %423 = vmatpush1.msra.mxu0 %v358
    %424 = vmatprep.subr.mxu0 0.0
    %425 = vmatpush1.msra.mxu0 %v359
    %426 = vmatprep.subr.mxu0 0.0
    %427 = vmatpush1.msra.mxu0 %v360
    %428 = vmatprep.subr.mxu0 0.0
    %429 = vmatpush1.msra.mxu0 %v361
    %430 = vmatprep.subr.mxu0 0.0
    %431 = vmatpush1.msra.mxu0 %v362
    %432 = vmatprep.subr.mxu0 0.0
    %433 = vmatpush1.msra.mxu0 %v363
    %434 = vmatprep.subr.mxu0 0.0
    %435 = vmatpush1.msra.mxu0 %v364
    %436 = vmatprep.mubr.f32.mxu0 %v322
    %437 = vmatmul.mubr.f32.gmra.mrb[0].mxu0 %v321
    %v438 = vpop.f32.mrb[0].mxu0
    %v439 = vadd.f32 %v370, %v438
    %v440 = vpop.f32.mrb[0].mxu0
    %441 = vmatprep.mubr.f32.mxu0 %v324
    %442 = vmatmul.mubr.f32.gmra.mrb[0].mxu0 %v323
    %v443 = vpop.f32.mrb[0].mxu0
    %v444 = vadd.f32 %v370, %v443
    %v445 = vpop.f32.mrb[0].mxu0
    %446 = vmatprep.mubr.f32.mxu0 %v326
    %447 = vmatmul.mubr.f32.gmra.mrb[0].mxu0 %v325
    %v448 = vpop.f32.mrb[0].mxu0
    %v449 = vadd.f32 %v370, %v448
    %v450 = vpop.f32.mrb[0].mxu0
    %451 = vmatprep.mubr.f32.mxu0 %v328
    %452 = vmatmul.mubr.f32.gmra.mrb[0].mxu0 %v327
    %v453 = vpop.f32.mrb[0].mxu0
    %v454 = vadd.f32 %v370, %v453
    %v455 = vpop.f32.mrb[0].mxu0
    %456 = vmatprep.mubr.f32.mxu0 %v330
    %457 = vmatmul.mubr.f32.gmra.mrb[0].mxu0 %v329
    %v458 = vpop.f32.mrb[0].mxu0
    %v459 = vadd.f32 %v370, %v458
    %v460 = vpop.f32.mrb[0].mxu0
    %461 = vmatprep.mubr.f32.mxu0 %v332
    %462 = vmatmul.mubr.f32.gmra.mrb[0].mxu0 %v331
    %v463 = vpop.f32.mrb[0].mxu0
    %v464 = vadd.f32 %v370, %v463
    %v465 = vpop.f32.mrb[0].mxu0
    %466 = vdwg.mxu0
    %v467 = vmul.f32 %v439, 0.5
    %v468 = vmul.f32 %v444, 0.5
    %v469 = vmul.f32 %v449, 0.5
    %v470 = vmul.f32 %v454, 0.5
    %v471 = vmul.f32 %v459, 0.5
    %v472 = vmul.f32 %v464, 0.5
    %v473 = vmul.f32 %v467, 1.442695
    %v474 = vpow.pop %v473
    %v475 = vmul.f32 %v468, 1.442695
    %v476 = vpow.pop %v475
    %v477 = vmul.f32 %v469, 1.442695
    %v478 = vpow.pop %v477
    %v479 = vmul.f32 %v470, 1.442695
    %v480 = vpow.pop %v479
    %v481 = vmul.f32 %v471, 1.442695
    %v482 = vpow.pop %v481
    %v483 = vmul.f32 %v472, 1.442695
    %v484 = vpow.pop %v483
    %v485 = vld [vmem:[%s1] sm:$0xff]
    %v486 = vld [vmem:[%s1 + $0x8] sm:$0xff]
    %v487 = vld [vmem:[%s1 + $0x10] sm:$0xff]
    %v488 = vld [vmem:[%s1 + $0x18] sm:$0xff]
    %v489 = vld [vmem:[%s1 + $0x20] sm:$0xff]
    %v490 = vld [vmem:[%s1 + $0x28] sm:$0xff]
    %497 = vrot.lane.b32.xlu0 %v474, 124
    %v498 = vpop.permute.xlu0 %497
    %499 = vrot.lane.b32.xlu0 %v476, 124
    %v500 = vpop.permute.xlu0 %499
    %501 = vrot.lane.b32.xlu0 %v478, 124
    %v502 = vpop.permute.xlu0 %501
    %503 = vrot.lane.b32.xlu0 %v480, 124
    %v504 = vpop.permute.xlu0 %503
    %505 = vrot.lane.b32.xlu0 %v482, 124
    %v506 = vpop.permute.xlu0 %505
    %507 = vrot.lane.b32.xlu0 %v484, 124
    %v508 = vpop.permute.xlu0 %507
    %v515 = vmul.f32 %v485, %v498
    %v516 = vmul.f32 %v486, %v500
    %v517 = vmul.f32 %v487, %v502
    %v518 = vmul.f32 %v488, %v504
    %v519 = vmul.f32 %v489, %v506
    %v520 = vmul.f32 %v490, %v508
    %v521 = vadd.f32 %v439, %v515
    %v522 = vadd.f32 %v444, %v516
    %v523 = vadd.f32 %v449, %v517
    %v524 = vadd.f32 %v454, %v518
    %v525 = vadd.f32 %v459, %v519
    %v526 = vadd.f32 %v464, %v520
    %v527 = vld [vmem:[%s6] sm:$0xff]
    %v528 = vld [vmem:[%s6 + $0x8] sm:$0xf]
    %v529 = vld [vmem:[%s7] sm:$0x7]
    %v531 = vlaneseq
    %v532 = vshrl.u32 %v531, 7
    %v533 = vsub.s32 0, %v532
    %v534 = vrot.slane %v529, %v533
    %v535 = vlaneseq
    %v536 = vshrl.u32 %v535, 7
    %v537 = vsub.s32 1, %v536
    %v538 = vrot.slane %v529, %v537
    %v539 = vlaneseq
    %v540 = vshrl.u32 %v539, 7
    %v541 = vsub.s32 2, %v540
    %v542 = vrot.slane %v529, %v541
    %v548 = vcombine.high %v527, %v527
    %vm549 = vcmask 31744
    %v551 = vsel %vm549, %v521, 0
    %v554 = vsel %vm549, %v522, 0
    %v557 = vsel %vm549, %v523, 0
    %v560 = vsel %vm549, %v524, 0
    %v563 = vsel %vm549, %v525, 0
    %v566 = vsel %vm549, %v526, 0
    %vm568 = vcmask 1043456
    %v569 = vsel %vm568, %v527, 0
    %v571 = vsel %vm568, %v548, 0
    %v573 = vsel %vm568, %v528, 0
    %575 = vmatprep.subr.mxu0 %v571
    %576 = vmatpush1.msra.mxu0 %v569
    %577 = vmatprep.subr.mxu0 0.0
    %578 = vmatpush1.msra.mxu0 0.0
    %579 = vmatprep.subr.mxu0 0.0
    %580 = vmatpush1.msra.mxu0 0.0
    %581 = vmatprep.subr.mxu0 0.0
    %582 = vmatpush1.msra.mxu0 0.0
    %583 = vmatprep.subr.mxu0 0.0
    %584 = vmatpush1.msra.mxu0 0.0
    %585 = vmatprep.subr.mxu0 0.0
    %586 = vmatpush1.msra.mxu0 0.0
    %587 = vmatprep.subr.mxu0 0.0
    %588 = vmatpush1.msra.mxu0 0.0
    %589 = vmatprep.subr.mxu0 0.0
    %590 = vmatpush1.msra.mxu0 0.0
    %591 = vmatprep.subr.mxu0 0.0
    %592 = vmatpush1.msra.mxu0 0.0
    %593 = vmatprep.subr.mxu0 0.0
    %594 = vmatpush1.msra.mxu0 0.0
    %595 = vmatprep.subr.mxu0 0.0
    %596 = vmatpush1.msra.mxu0 0.0
    %597 = vmatprep.subr.mxu0 0.0
    %598 = vmatpush1.msra.mxu0 0.0
    %599 = vmatprep.subr.mxu0 0.0
    %600 = vmatpush1.msra.mxu0 0.0
    %601 = vmatprep.subr.mxu0 0.0
    %602 = vmatpush1.msra.mxu0 0.0
    %603 = vmatprep.subr.mxu0 0.0
    %604 = vmatpush1.msra.mxu0 0.0
    %605 = vmatprep.subr.mxu0 0.0
    %606 = vmatpush1.msra.mxu0 0.0
    %607 = vmatprep.subr.mxu0 0.0
    %608 = vmatpush1.msra.mxu0 0.0
    %609 = vmatprep.subr.mxu0 0.0
    %610 = vmatpush1.msra.mxu0 0.0
    %611 = vmatprep.subr.mxu0 0.0
    %612 = vmatpush1.msra.mxu0 0.0
    %613 = vmatprep.subr.mxu0 0.0
    %614 = vmatpush1.msra.mxu0 0.0
    %615 = vmatprep.subr.mxu0 0.0
    %616 = vmatpush1.msra.mxu0 0.0
    %617 = vmatprep.subr.mxu0 0.0
    %618 = vmatpush1.msra.mxu0 0.0
    %619 = vmatprep.subr.mxu0 0.0
    %620 = vmatpush1.msra.mxu0 0.0
    %621 = vmatprep.subr.mxu0 0.0
    %622 = vmatpush1.msra.mxu0 0.0
    %623 = vmatprep.subr.mxu0 0.0
    %624 = vmatpush1.msra.mxu0 0.0
    %625 = vmatprep.subr.mxu0 0.0
    %626 = vmatpush1.msra.mxu0 0.0
    %627 = vmatprep.subr.mxu0 0.0
    %628 = vmatpush1.msra.mxu0 0.0
    %629 = vmatprep.subr.mxu0 0.0
    %630 = vmatpush1.msra.mxu0 0.0
    %631 = vmatprep.subr.mxu0 0.0
    %632 = vmatpush1.msra.mxu0 0.0
    %633 = vmatprep.subr.mxu0 0.0
    %634 = vmatpush1.msra.mxu0 0.0
    %635 = vmatprep.subr.mxu0 0.0
    %636 = vmatpush1.msra.mxu0 0.0
    %637 = vmatprep.subr.mxu0 0.0
    %638 = vmatpush1.msra.mxu0 0.0
    %639 = vmatprep.mubr.f32.mxu0 0.0
    %640 = vmatmul.mubr.f32.gmra.mrb[0].mxu0 %v551
    %v641 = vpop.f32.mrb[0].mxu0
    %v642 = vadd.f32 %v534, %v641
    %v643 = vpop.f32.mrb[0].mxu0
    %v644 = vadd.f32 %v538, %v643
    %645 = vmatprep.mubr.f32.mxu0 0.0
    %646 = vmatmul.mubr.f32.gmra.mrb[0].mxu0 %v554
    %v647 = vpop.f32.mrb[0].mxu0
    %v648 = vadd.f32 %v534, %v647
    %v649 = vpop.f32.mrb[0].mxu0
    %v650 = vadd.f32 %v538, %v649
    %651 = vmatprep.mubr.f32.mxu0 0.0
    %652 = vmatmul.mubr.f32.gmra.mrb[0].mxu0 %v557
    %v653 = vpop.f32.mrb[0].mxu0
    %v654 = vadd.f32 %v534, %v653
    %v655 = vpop.f32.mrb[0].mxu0
    %v656 = vadd.f32 %v538, %v655
    %657 = vmatprep.mubr.f32.mxu0 0.0
    %658 = vmatmul.mubr.f32.gmra.mrb[0].mxu0 %v560
    %v659 = vpop.f32.mrb[0].mxu0
    %v660 = vadd.f32 %v534, %v659
    %v661 = vpop.f32.mrb[0].mxu0
    %v662 = vadd.f32 %v538, %v661
    %663 = vmatprep.mubr.f32.mxu0 0.0
    %664 = vmatmul.mubr.f32.gmra.mrb[0].mxu0 %v563
    %v665 = vpop.f32.mrb[0].mxu0
    %v666 = vadd.f32 %v534, %v665
    %v667 = vpop.f32.mrb[0].mxu0
    %v668 = vadd.f32 %v538, %v667
    %669 = vmatprep.mubr.f32.mxu0 0.0
    %670 = vmatmul.mubr.f32.gmra.mrb[0].mxu0 %v566
    %v671 = vpop.f32.mrb[0].mxu0
    %v672 = vadd.f32 %v534, %v671
    %v673 = vpop.f32.mrb[0].mxu0
    %v674 = vadd.f32 %v538, %v673
    %675 = vdwg.mxu0
    %676 = vmatprep.subr.mxu0 0.0
    %677 = vmatpush1.msra.mxu0 %v573
    %678 = vmatprep.subr.mxu0 0.0
    %679 = vmatpush1.msra.mxu0 0.0
    %680 = vmatprep.subr.mxu0 0.0
    %681 = vmatpush1.msra.mxu0 0.0
    %682 = vmatprep.subr.mxu0 0.0
    %683 = vmatpush1.msra.mxu0 0.0
    %684 = vmatprep.subr.mxu0 0.0
    %685 = vmatpush1.msra.mxu0 0.0
    %686 = vmatprep.subr.mxu0 0.0
    %687 = vmatpush1.msra.mxu0 0.0
    %688 = vmatprep.subr.mxu0 0.0
    %689 = vmatpush1.msra.mxu0 0.0
    %690 = vmatprep.subr.mxu0 0.0
    %691 = vmatpush1.msra.mxu0 0.0
    %692 = vmatprep.subr.mxu0 0.0
    %693 = vmatpush1.msra.mxu0 0.0
    %694 = vmatprep.subr.mxu0 0.0
    %695 = vmatpush1.msra.mxu0 0.0
    %696 = vmatprep.subr.mxu0 0.0
    %697 = vmatpush1.msra.mxu0 0.0
    %698 = vmatprep.subr.mxu0 0.0
    %699 = vmatpush1.msra.mxu0 0.0
    %700 = vmatprep.subr.mxu0 0.0
    %701 = vmatpush1.msra.mxu0 0.0
    %702 = vmatprep.subr.mxu0 0.0
    %703 = vmatpush1.msra.mxu0 0.0
    %704 = vmatprep.subr.mxu0 0.0
    %705 = vmatpush1.msra.mxu0 0.0
    %706 = vmatprep.subr.mxu0 0.0
    %707 = vmatpush1.msra.mxu0 0.0
    %708 = vmatprep.subr.mxu0 0.0
    %709 = vmatpush1.msra.mxu0 0.0
    %710 = vmatprep.subr.mxu0 0.0
    %711 = vmatpush1.msra.mxu0 0.0
    %712 = vmatprep.subr.mxu0 0.0
    %713 = vmatpush1.msra.mxu0 0.0
    %714 = vmatprep.subr.mxu0 0.0
    %715 = vmatpush1.msra.mxu0 0.0
    %716 = vmatprep.subr.mxu0 0.0
    %717 = vmatpush1.msra.mxu0 0.0
    %718 = vmatprep.subr.mxu0 0.0
    %719 = vmatpush1.msra.mxu0 0.0
    %720 = vmatprep.subr.mxu0 0.0
    %721 = vmatpush1.msra.mxu0 0.0
    %722 = vmatprep.subr.mxu0 0.0
    %723 = vmatpush1.msra.mxu0 0.0
    %724 = vmatprep.subr.mxu0 0.0
    %725 = vmatpush1.msra.mxu0 0.0
    %726 = vmatprep.subr.mxu0 0.0
    %727 = vmatpush1.msra.mxu0 0.0
    %728 = vmatprep.subr.mxu0 0.0
    %729 = vmatpush1.msra.mxu0 0.0
    %730 = vmatprep.subr.mxu0 0.0
    %731 = vmatpush1.msra.mxu0 0.0
    %732 = vmatprep.subr.mxu0 0.0
    %733 = vmatpush1.msra.mxu0 0.0
    %734 = vmatprep.subr.mxu0 0.0
    %735 = vmatpush1.msra.mxu0 0.0
    %736 = vmatprep.subr.mxu0 0.0
    %737 = vmatpush1.msra.mxu0 0.0
    %738 = vmatprep.subr.mxu0 0.0
    %739 = vmatpush1.msra.mxu0 0.0
    %740 = vmatprep.mubr.f32.mxu0 0.0
    %741 = vmatmul.mubr.f32.gmra.mrb[0].mxu0 %v551
    %v742 = vpop.f32.mrb[0].mxu0
    %v743 = vadd.f32 %v542, %v742
    %v744 = vpop.f32.mrb[0].mxu0
    %745 = vmatprep.mubr.f32.mxu0 0.0
    %746 = vmatmul.mubr.f32.gmra.mrb[0].mxu0 %v554
    %v747 = vpop.f32.mrb[0].mxu0
    %v748 = vadd.f32 %v542, %v747
    %v749 = vpop.f32.mrb[0].mxu0
    %750 = vmatprep.mubr.f32.mxu0 0.0
    %751 = vmatmul.mubr.f32.gmra.mrb[0].mxu0 %v557
    %v752 = vpop.f32.mrb[0].mxu0
    %v753 = vadd.f32 %v542, %v752
    %v754 = vpop.f32.mrb[0].mxu0
    %755 = vmatprep.mubr.f32.mxu0 0.0
    %756 = vmatmul.mubr.f32.gmra.mrb[0].mxu0 %v560
    %v757 = vpop.f32.mrb[0].mxu0
    %v758 = vadd.f32 %v542, %v757
    %v759 = vpop.f32.mrb[0].mxu0
    %760 = vmatprep.mubr.f32.mxu0 0.0
    %761 = vmatmul.mubr.f32.gmra.mrb[0].mxu0 %v563
    %v762 = vpop.f32.mrb[0].mxu0
    %v763 = vadd.f32 %v542, %v762
    %v764 = vpop.f32.mrb[0].mxu0
    %765 = vmatprep.mubr.f32.mxu0 0.0
    %766 = vmatmul.mubr.f32.gmra.mrb[0].mxu0 %v566
    %v767 = vpop.f32.mrb[0].mxu0
    %v768 = vadd.f32 %v542, %v767
    %v769 = vpop.f32.mrb[0].mxu0
    %770 = vdwg.mxu0
    %v771 = vmax.f32 %v642, 0.0
    %v772 = vmax.f32 %v644, 0.0
    %v773 = vmax.f32 %v743, 0.0
    %v774 = vmax.f32 %v648, 0.0
    %v775 = vmax.f32 %v650, 0.0
    %v776 = vmax.f32 %v748, 0.0
    %v777 = vmax.f32 %v654, 0.0
    %v778 = vmax.f32 %v656, 0.0
    %v779 = vmax.f32 %v753, 0.0
    %v780 = vmax.f32 %v660, 0.0
    %v781 = vmax.f32 %v662, 0.0
    %v782 = vmax.f32 %v758, 0.0
    %v783 = vmax.f32 %v666, 0.0
    %v784 = vmax.f32 %v668, 0.0
    %v785 = vmax.f32 %v763, 0.0
    %v786 = vmax.f32 %v672, 0.0
    %v787 = vmax.f32 %v674, 0.0
    %v788 = vmax.f32 %v768, 0.0
    %v789 = vld [vmem:[%s8] sm:$0xff]
    %v790 = vld [vmem:[%s8 + $0x8] sm:$0xff]
    %v791 = vld [vmem:[%s8 + $0x10] sm:$0xff]
    %v792 = vld [vmem:[%s8 + $0x18] sm:$0xff]
    %v793 = vld [vmem:[%s8 + $0x20] sm:$0xff]
    %v794 = vld [vmem:[%s8 + $0x28] sm:$0xff]
    %v795 = vld [vmem:[%s8 + $0x30] sm:$0xff]
    %v796 = vld [vmem:[%s8 + $0x38] sm:$0xff]
    %v797 = vld [vmem:[%s8 + $0x40] sm:$0xff]
    %v798 = vld [vmem:[%s8 + $0x48] sm:$0xff]
    %v799 = vld [vmem:[%s8 + $0x50] sm:$0xff]
    %v800 = vld [vmem:[%s8 + $0x58] sm:$0xff]
    %v801 = vld [vmem:[%s8 + $0x60] sm:$0xff]
    %v802 = vld [vmem:[%s8 + $0x68] sm:$0xff]
    %v803 = vld [vmem:[%s8 + $0x70] sm:$0xff]
    %v804 = vld [vmem:[%s8 + $0x78] sm:$0xff]
    %v805 = vld [vmem:[%s8 + $0x80] sm:$0xff]
    %v806 = vld [vmem:[%s8 + $0x88] sm:$0xff]
    %v807 = vld [vmem:[%s8 + $0x90] sm:$0xff]
    %v808 = vld [vmem:[%s8 + $0x98] sm:$0xff]
    %v809 = vld [vmem:[%s8 + $0xa0] sm:$0xff]
    %v810 = vld [vmem:[%s8 + $0xa8] sm:$0xff]
    %v811 = vld [vmem:[%s8 + $0xb0] sm:$0xff]
    %v812 = vld [vmem:[%s8 + $0xb8] sm:$0xff]
    %v813 = vld [vmem:[%s8 + $0xc0] sm:$0xff]
    %v814 = vld [vmem:[%s8 + $0xc8] sm:$0xff]
    %v815 = vld [vmem:[%s8 + $0xd0] sm:$0xff]
    %v816 = vld [vmem:[%s8 + $0xd8] sm:$0xff]
    %v817 = vld [vmem:[%s8 + $0xe0] sm:$0xff]
    %v818 = vld [vmem:[%s8 + $0xe8] sm:$0xff]
    %v819 = vld [vmem:[%s8 + $0xf0] sm:$0xff]
    %v820 = vld [vmem:[%s8 + $0xf8] sm:$0xff]
    %v821 = vld [vmem:[%s8 + $0x100] sm:$0xff]
    %v822 = vld [vmem:[%s8 + $0x108] sm:$0xff]
    %v823 = vld [vmem:[%s8 + $0x110] sm:$0xff]
    %v824 = vld [vmem:[%s8 + $0x118] sm:$0xff]
    %v825 = vld [vmem:[%s8 + $0x120] sm:$0xff]
    %v826 = vld [vmem:[%s8 + $0x128] sm:$0xff]
    %v827 = vld [vmem:[%s8 + $0x130] sm:$0xff]
    %v828 = vld [vmem:[%s8 + $0x138] sm:$0xff]
    %v829 = vld [vmem:[%s8 + $0x140] sm:$0xff]
    %v830 = vld [vmem:[%s8 + $0x148] sm:$0xff]
    %v831 = vld [vmem:[%s8 + $0x150] sm:$0xff]
    %v832 = vld [vmem:[%s8 + $0x158] sm:$0xff]
    %v833 = vld [vmem:[%s8 + $0x160] sm:$0xff]
    %v834 = vld [vmem:[%s8 + $0x168] sm:$0xff]
    %v835 = vld [vmem:[%s8 + $0x170] sm:$0xff]
    %v836 = vld [vmem:[%s8 + $0x178] sm:$0xff]
    %v837 = vld [vmem:[%s8 + $0x180] sm:$0xff]
    %v838 = vld [vmem:[%s8 + $0x188] sm:$0xff]
    %v839 = vld [vmem:[%s8 + $0x190] sm:$0xff]
    %v840 = vld [vmem:[%s8 + $0x198] sm:$0xff]
    %v841 = vld [vmem:[%s8 + $0x1a0] sm:$0xff]
    %v842 = vld [vmem:[%s8 + $0x1a8] sm:$0xff]
    %v843 = vld [vmem:[%s8 + $0x1b0] sm:$0xff]
    %v844 = vld [vmem:[%s8 + $0x1b8] sm:$0xff]
    %v845 = vld [vmem:[%s8 + $0x1c0] sm:$0xff]
    %v846 = vld [vmem:[%s8 + $0x1c8] sm:$0xff]
    %v847 = vld [vmem:[%s8 + $0x1d0] sm:$0xff]
    %v848 = vld [vmem:[%s8 + $0x1d8] sm:$0xff]
    %v849 = vld [vmem:[%s8 + $0x1e0] sm:$0xff]
    %v850 = vld [vmem:[%s8 + $0x1e8] sm:$0xff]
    %v851 = vld [vmem:[%s8 + $0x1f0] sm:$0xff]
    %v852 = vld [vmem:[%s8 + $0x1f8] sm:$0xff]
    %v853 = vld [vmem:[#allocation8] sm:$0x3]
    %v855 = vlaneseq
    %v856 = vshrl.u32 %v855, 7
    %v857 = vsub.s32 0, %v856
    %v858 = vrot.slane %v853, %v857
    %v859 = vlaneseq
    %v860 = vshrl.u32 %v859, 7
    %v861 = vsub.s32 1, %v860
    %v862 = vrot.slane %v853, %v861
    %865 = vmatprep.subr.mxu0 %v790
    %866 = vmatpush1.msra.mxu0 %v789
    %867 = vmatprep.subr.mxu0 %v792
    %868 = vmatpush1.msra.mxu0 %v791
    %869 = vmatprep.subr.mxu0 %v794
    %870 = vmatpush1.msra.mxu0 %v793
    %871 = vmatprep.subr.mxu0 %v796
    %872 = vmatpush1.msra.mxu0 %v795
    %873 = vmatprep.subr.mxu0 %v798
    %874 = vmatpush1.msra.mxu0 %v797
    %875 = vmatprep.subr.mxu0 %v800
    %876 = vmatpush1.msra.mxu0 %v799
    %877 = vmatprep.subr.mxu0 %v802
    %878 = vmatpush1.msra.mxu0 %v801
    %879 = vmatprep.subr.mxu0 %v804
    %880 = vmatpush1.msra.mxu0 %v803
    %881 = vmatprep.subr.mxu0 %v806
    %882 = vmatpush1.msra.mxu0 %v805
    %883 = vmatprep.subr.mxu0 %v808
    %884 = vmatpush1.msra.mxu0 %v807
    %885 = vmatprep.subr.mxu0 %v810
    %886 = vmatpush1.msra.mxu0 %v809
    %887 = vmatprep.subr.mxu0 %v812
    %888 = vmatpush1.msra.mxu0 %v811
    %889 = vmatprep.subr.mxu0 %v814
    %890 = vmatpush1.msra.mxu0 %v813
    %891 = vmatprep.subr.mxu0 %v816
    %892 = vmatpush1.msra.mxu0 %v815
    %893 = vmatprep.subr.mxu0 %v818
    %894 = vmatpush1.msra.mxu0 %v817
    %895 = vmatprep.subr.mxu0 %v820
    %896 = vmatpush1.msra.mxu0 %v819
    %897 = vmatprep.subr.mxu0 %v822
    %898 = vmatpush1.msra.mxu0 %v821
    %899 = vmatprep.subr.mxu0 %v824
    %900 = vmatpush1.msra.mxu0 %v823
    %901 = vmatprep.subr.mxu0 %v826
    %902 = vmatpush1.msra.mxu0 %v825
    %903 = vmatprep.subr.mxu0 %v828
    %904 = vmatpush1.msra.mxu0 %v827
    %905 = vmatprep.subr.mxu0 %v830
    %906 = vmatpush1.msra.mxu0 %v829
    %907 = vmatprep.subr.mxu0 %v832
    %908 = vmatpush1.msra.mxu0 %v831
    %909 = vmatprep.subr.mxu0 %v834
    %910 = vmatpush1.msra.mxu0 %v833
    %911 = vmatprep.subr.mxu0 %v836
    %912 = vmatpush1.msra.mxu0 %v835
    %913 = vmatprep.subr.mxu0 %v838
    %914 = vmatpush1.msra.mxu0 %v837
    %915 = vmatprep.subr.mxu0 %v840
    %916 = vmatpush1.msra.mxu0 %v839
    %917 = vmatprep.subr.mxu0 %v842
    %918 = vmatpush1.msra.mxu0 %v841
    %919 = vmatprep.subr.mxu0 %v844
    %920 = vmatpush1.msra.mxu0 %v843
    %921 = vmatprep.subr.mxu0 %v846
    %922 = vmatpush1.msra.mxu0 %v845
    %923 = vmatprep.subr.mxu0 %v848
    %924 = vmatpush1.msra.mxu0 %v847
    %925 = vmatprep.subr.mxu0 %v850
    %926 = vmatpush1.msra.mxu0 %v849
    %927 = vmatprep.subr.mxu0 %v852
    %928 = vmatpush1.msra.mxu0 %v851
    %929 = vmatprep.mubr.f32.mxu0 %v772
    %930 = vmatmul.mubr.f32.gmra.mrb[0].mxu0 %v771
    %v931 = vpop.f32.mrb[0].mxu0
    %v932 = vadd.f32 %v858, %v931
    %v933 = vpop.f32.mrb[0].mxu0
    %v934 = vadd.f32 %v862, %v933
    %935 = vmatprep.mubr.f32.mxu0 %v775
    %936 = vmatmul.mubr.f32.gmra.mrb[0].mxu0 %v774
    %v937 = vpop.f32.mrb[0].mxu0
    %v938 = vadd.f32 %v858, %v937
    %v939 = vpop.f32.mrb[0].mxu0
    %v940 = vadd.f32 %v862, %v939
    %941 = vmatprep.mubr.f32.mxu0 %v778
    %942 = vmatmul.mubr.f32.gmra.mrb[0].mxu0 %v777
    %v943 = vpop.f32.mrb[0].mxu0
    %v944 = vadd.f32 %v858, %v943
    %v945 = vpop.f32.mrb[0].mxu0
    %v946 = vadd.f32 %v862, %v945
    %947 = vmatprep.mubr.f32.mxu0 %v781
    %948 = vmatmul.mubr.f32.gmra.mrb[0].mxu0 %v780
    %v949 = vpop.f32.mrb[0].mxu0
    %v950 = vadd.f32 %v858, %v949
    %v951 = vpop.f32.mrb[0].mxu0
    %v952 = vadd.f32 %v862, %v951
    %953 = vmatprep.mubr.f32.mxu0 %v784
    %954 = vmatmul.mubr.f32.gmra.mrb[0].mxu0 %v783
    %v955 = vpop.f32.mrb[0].mxu0
    %v956 = vadd.f32 %v858, %v955
    %v957 = vpop.f32.mrb[0].mxu0
    %v958 = vadd.f32 %v862, %v957
    %959 = vmatprep.mubr.f32.mxu0 %v787
    %960 = vmatmul.mubr.f32.gmra.mrb[0].mxu0 %v786
    %v961 = vpop.f32.mrb[0].mxu0
    %v962 = vadd.f32 %v858, %v961
    %v963 = vpop.f32.mrb[0].mxu0
    %v964 = vadd.f32 %v862, %v963
    %965 = vdwg.mxu0
    %v966 = vmax.f32 %v932, 0.0
    %v967 = vmax.f32 %v934, 0.0
    %v968 = vmax.f32 %v938, 0.0
    %v969 = vmax.f32 %v940, 0.0
    %v970 = vmax.f32 %v944, 0.0
    %v971 = vmax.f32 %v946, 0.0
    %v972 = vmax.f32 %v950, 0.0
    %v973 = vmax.f32 %v952, 0.0
    %v974 = vmax.f32 %v956, 0.0
    %v975 = vmax.f32 %v958, 0.0
    %v976 = vmax.f32 %v962, 0.0
    %v977 = vmax.f32 %v964, 0.0
    %v978 = vld [vmem:[%s10] sm:$0xff]
    %v979 = vld [vmem:[%s10 + $0x8] sm:$0xff]
    %v980 = vld [vmem:[%s10 + $0x10] sm:$0xff]
    %v981 = vld [vmem:[%s10 + $0x18] sm:$0xff]
    %v982 = vld [vmem:[%s10 + $0x20] sm:$0xff]
    %v983 = vld [vmem:[%s10 + $0x28] sm:$0xff]
    %v984 = vld [vmem:[%s10 + $0x30] sm:$0xff]
    %v985 = vld [vmem:[%s10 + $0x38] sm:$0xff]
    %v986 = vld [vmem:[%s10 + $0x40] sm:$0xff]
    %v987 = vld [vmem:[%s10 + $0x48] sm:$0xff]
    %v988 = vld [vmem:[%s10 + $0x50] sm:$0xff]
    %v989 = vld [vmem:[%s10 + $0x58] sm:$0xff]
    %v990 = vld [vmem:[%s10 + $0x60] sm:$0xff]
    %v991 = vld [vmem:[%s10 + $0x68] sm:$0xff]
    %v992 = vld [vmem:[%s10 + $0x70] sm:$0xff]
    %v993 = vld [vmem:[%s10 + $0x78] sm:$0xff]
    %v994 = vld [vmem:[%s10 + $0x80] sm:$0xff]
    %v995 = vld [vmem:[%s10 + $0x88] sm:$0xff]
    %v996 = vld [vmem:[%s10 + $0x90] sm:$0xff]
    %v997 = vld [vmem:[%s10 + $0x98] sm:$0xff]
    %v998 = vld [vmem:[%s10 + $0xa0] sm:$0xff]
    %v999 = vld [vmem:[%s10 + $0xa8] sm:$0xff]
    %v1000 = vld [vmem:[%s10 + $0xb0] sm:$0xff]
    %v1001 = vld [vmem:[%s10 + $0xb8] sm:$0xff]
    %v1002 = vld [vmem:[%s10 + $0xc0] sm:$0xff]
    %v1003 = vld [vmem:[%s10 + $0xc8] sm:$0xff]
    %v1004 = vld [vmem:[%s10 + $0xd0] sm:$0xff]
    %v1005 = vld [vmem:[%s10 + $0xd8] sm:$0xff]
    %v1006 = vld [vmem:[%s10 + $0xe0] sm:$0xff]
    %v1007 = vld [vmem:[%s10 + $0xe8] sm:$0xff]
    %v1008 = vld [vmem:[%s10 + $0xf0] sm:$0xff]
    %v1009 = vld [vmem:[%s10 + $0xf8] sm:$0xff]
    %v1010 = vld [vmem:[#allocation10] sm:$0x1]
    %v1012 = vlaneseq
    %v1013 = vshrl.u32 %v1012, 7
    %v1014 = vsub.s32 0, %v1013
    %v1015 = vrot.slane %v1010, %v1014
    %1017 = vmatprep.subr.mxu0 0.0
    %1018 = vmatpush1.msra.mxu0 %v978
    %1019 = vmatprep.subr.mxu0 0.0
    %1020 = vmatpush1.msra.mxu0 %v979
    %1021 = vmatprep.subr.mxu0 0.0
    %1022 = vmatpush1.msra.mxu0 %v980
    %1023 = vmatprep.subr.mxu0 0.0
    %1024 = vmatpush1.msra.mxu0 %v981
    %1025 = vmatprep.subr.mxu0 0.0
    %1026 = vmatpush1.msra.mxu0 %v982
    %1027 = vmatprep.subr.mxu0 0.0
    %1028 = vmatpush1.msra.mxu0 %v983
    %1029 = vmatprep.subr.mxu0 0.0
    %1030 = vmatpush1.msra.mxu0 %v984
    %1031 = vmatprep.subr.mxu0 0.0
    %1032 = vmatpush1.msra.mxu0 %v985
    %1033 = vmatprep.subr.mxu0 0.0
    %1034 = vmatpush1.msra.mxu0 %v986
    %1035 = vmatprep.subr.mxu0 0.0
    %1036 = vmatpush1.msra.mxu0 %v987
    %1037 = vmatprep.subr.mxu0 0.0
    %1038 = vmatpush1.msra.mxu0 %v988
    %1039 = vmatprep.subr.mxu0 0.0
    %1040 = vmatpush1.msra.mxu0 %v989
    %1041 = vmatprep.subr.mxu0 0.0
    %1042 = vmatpush1.msra.mxu0 %v990
    %1043 = vmatprep.subr.mxu0 0.0
    %1044 = vmatpush1.msra.mxu0 %v991
    %1045 = vmatprep.subr.mxu0 0.0
    %1046 = vmatpush1.msra.mxu0 %v992
    %1047 = vmatprep.subr.mxu0 0.0
    %1048 = vmatpush1.msra.mxu0 %v993
    %1049 = vmatprep.subr.mxu0 0.0
    %1050 = vmatpush1.msra.mxu0 %v994
    %1051 = vmatprep.subr.mxu0 0.0
    %1052 = vmatpush1.msra.mxu0 %v995
    %1053 = vmatprep.subr.mxu0 0.0
    %1054 = vmatpush1.msra.mxu0 %v996
    %1055 = vmatprep.subr.mxu0 0.0
    %1056 = vmatpush1.msra.mxu0 %v997
    %1057 = vmatprep.subr.mxu0 0.0
    %1058 = vmatpush1.msra.mxu0 %v998
    %1059 = vmatprep.subr.mxu0 0.0
    %1060 = vmatpush1.msra.mxu0 %v999
    %1061 = vmatprep.subr.mxu0 0.0
    %1062 = vmatpush1.msra.mxu0 %v1000
    %1063 = vmatprep.subr.mxu0 0.0
    %1064 = vmatpush1.msra.mxu0 %v1001
    %1065 = vmatprep.subr.mxu0 0.0
    %1066 = vmatpush1.msra.mxu0 %v1002
    %1067 = vmatprep.subr.mxu0 0.0
    %1068 = vmatpush1.msra.mxu0 %v1003
    %1069 = vmatprep.subr.mxu0 0.0
    %1070 = vmatpush1.msra.mxu0 %v1004
    %1071 = vmatprep.subr.mxu0 0.0
    %1072 = vmatpush1.msra.mxu0 %v1005
    %1073 = vmatprep.subr.mxu0 0.0
    %1074 = vmatpush1.msra.mxu0 %v1006
    %1075 = vmatprep.subr.mxu0 0.0
    %1076 = vmatpush1.msra.mxu0 %v1007
    %1077 = vmatprep.subr.mxu0 0.0
    %1078 = vmatpush1.msra.mxu0 %v1008
    %1079 = vmatprep.subr.mxu0 0.0
    %1080 = vmatpush1.msra.mxu0 %v1009
    %1081 = vmatprep.mubr.f32.mxu0 %v967
    %1082 = vmatmul.mubr.f32.gmra.mrb[0].mxu0 %v966
    %v1083 = vpop.f32.mrb[0].mxu0
    %v1084 = vadd.f32 %v1015, %v1083
    %v1085 = vpop.f32.mrb[0].mxu0
    %1086 = vmatprep.mubr.f32.mxu0 %v969
    %1087 = vmatmul.mubr.f32.gmra.mrb[0].mxu0 %v968
    %v1088 = vpop.f32.mrb[0].mxu0
    %v1089 = vadd.f32 %v1015, %v1088
    %v1090 = vpop.f32.mrb[0].mxu0
    %1091 = vmatprep.mubr.f32.mxu0 %v971
    %1092 = vmatmul.mubr.f32.gmra.mrb[0].mxu0 %v970
    %v1093 = vpop.f32.mrb[0].mxu0
    %v1094 = vadd.f32 %v1015, %v1093
    %v1095 = vpop.f32.mrb[0].mxu0
    %1096 = vmatprep.mubr.f32.mxu0 %v973
    %1097 = vmatmul.mubr.f32.gmra.mrb[0].mxu0 %v972
    %v1098 = vpop.f32.mrb[0].mxu0
    %v1099 = vadd.f32 %v1015, %v1098
    %v1100 = vpop.f32.mrb[0].mxu0
    %1101 = vmatprep.mubr.f32.mxu0 %v975
    %1102 = vmatmul.mubr.f32.gmra.mrb[0].mxu0 %v974
    %v1103 = vpop.f32.mrb[0].mxu0
    %v1104 = vadd.f32 %v1015, %v1103
    %v1105 = vpop.f32.mrb[0].mxu0
    %1106 = vmatprep.mubr.f32.mxu0 %v977
    %1107 = vmatmul.mubr.f32.gmra.mrb[0].mxu0 %v976
    %v1108 = vpop.f32.mrb[0].mxu0
    %v1109 = vadd.f32 %v1015, %v1108
    %v1110 = vpop.f32.mrb[0].mxu0
    %1111 = vdwg.mxu0
    %v1112 = vld [vmem:[%s12] sm:$0xff]
    %v1113 = vld [vmem:[%s12 + $0x8] sm:$0xff]
    %v1114 = vld [vmem:[%s12 + $0x10] sm:$0xff]
    %v1115 = vld [vmem:[%s12 + $0x18] sm:$0xff]
    %v1116 = vld [vmem:[%s12 + $0x20] sm:$0xff]
    %v1117 = vld [vmem:[%s12 + $0x28] sm:$0xff]
    %v1118 = vld [vmem:[%s12 + $0x30] sm:$0xff]
    %v1119 = vld [vmem:[%s12 + $0x38] sm:$0xff]
    %v1120 = vld [vmem:[#allocation11] sm:$0x1]
    %v1122 = vlaneseq
    %v1123 = vshrl.u32 %v1122, 7
    %v1124 = vsub.s32 0, %v1123
    %v1125 = vrot.slane %v1120, %v1124
    %vm1127 = vcmask 523264
    %v1129 = vsel %vm1127, %v773, 0
    %v1132 = vsel %vm1127, %v776, 0
    %v1135 = vsel %vm1127, %v779, 0
    %v1138 = vsel %vm1127, %v782, 0
    %v1141 = vsel %vm1127, %v785, 0
    %v1144 = vsel %vm1127, %v788, 0
    %1146 = vmatprep.subr.mxu0 0.0
    %1147 = vmatpush1.msra.mxu0 %v1112
    %1148 = vmatprep.subr.mxu0 0.0
    %1149 = vmatpush1.msra.mxu0 %v1113
    %1150 = vmatprep.subr.mxu0 0.0
    %1151 = vmatpush1.msra.mxu0 %v1114
    %1152 = vmatprep.subr.mxu0 0.0
    %1153 = vmatpush1.msra.mxu0 %v1115
    %1154 = vmatprep.subr.mxu0 0.0
    %1155 = vmatpush1.msra.mxu0 %v1116
    %1156 = vmatprep.subr.mxu0 0.0
    %1157 = vmatpush1.msra.mxu0 %v1117
    %1158 = vmatprep.subr.mxu0 0.0
    %1159 = vmatpush1.msra.mxu0 %v1118
    %1160 = vmatprep.subr.mxu0 0.0
    %1161 = vmatpush1.msra.mxu0 %v1119
    %1162 = vmatprep.subr.mxu0 0.0
    %1163 = vmatpush1.msra.mxu0 0.0
    %1164 = vmatprep.subr.mxu0 0.0
    %1165 = vmatpush1.msra.mxu0 0.0
    %1166 = vmatprep.subr.mxu0 0.0
    %1167 = vmatpush1.msra.mxu0 0.0
    %1168 = vmatprep.subr.mxu0 0.0
    %1169 = vmatpush1.msra.mxu0 0.0
    %1170 = vmatprep.subr.mxu0 0.0
    %1171 = vmatpush1.msra.mxu0 0.0
    %1172 = vmatprep.subr.mxu0 0.0
    %1173 = vmatpush1.msra.mxu0 0.0
    %1174 = vmatprep.subr.mxu0 0.0
    %1175 = vmatpush1.msra.mxu0 0.0
    %1176 = vmatprep.subr.mxu0 0.0
    %1177 = vmatpush1.msra.mxu0 0.0
    %1178 = vmatprep.subr.mxu0 0.0
    %1179 = vmatpush1.msra.mxu0 0.0
    %1180 = vmatprep.subr.mxu0 0.0
    %1181 = vmatpush1.msra.mxu0 0.0
    %1182 = vmatprep.subr.mxu0 0.0
    %1183 = vmatpush1.msra.mxu0 0.0
    %1184 = vmatprep.subr.mxu0 0.0
    %1185 = vmatpush1.msra.mxu0 0.0
    %1186 = vmatprep.subr.mxu0 0.0
    %1187 = vmatpush1.msra.mxu0 0.0
    %1188 = vmatprep.subr.mxu0 0.0
    %1189 = vmatpush1.msra.mxu0 0.0
    %1190 = vmatprep.subr.mxu0 0.0
    %1191 = vmatpush1.msra.mxu0 0.0
    %1192 = vmatprep.subr.mxu0 0.0
    %1193 = vmatpush1.msra.mxu0 0.0
    %1194 = vmatprep.subr.mxu0 0.0
    %1195 = vmatpush1.msra.mxu0 0.0
    %1196 = vmatprep.subr.mxu0 0.0
    %1197 = vmatpush1.msra.mxu0 0.0
    %1198 = vmatprep.subr.mxu0 0.0
    %1199 = vmatpush1.msra.mxu0 0.0
    %1200 = vmatprep.subr.mxu0 0.0
    %1201 = vmatpush1.msra.mxu0 0.0
    %1202 = vmatprep.subr.mxu0 0.0
    %1203 = vmatpush1.msra.mxu0 0.0
    %1204 = vmatprep.subr.mxu0 0.0
    %1205 = vmatpush1.msra.mxu0 0.0
    %1206 = vmatprep.subr.mxu0 0.0
    %1207 = vmatpush1.msra.mxu0 0.0
    %1208 = vmatprep.subr.mxu0 0.0
    %1209 = vmatpush1.msra.mxu0 0.0
    %1210 = vmatprep.mubr.f32.mxu0 0.0
    %1211 = vmatmul.mubr.f32.gmra.mrb[0].mxu0 %v1129
    %v1212 = vpop.f32.mrb[0].mxu0
    %v1213 = vadd.f32 %v1125, %v1212
    %v1214 = vpop.f32.mrb[0].mxu0
    %1215 = vmatprep.mubr.f32.mxu0 0.0
    %1216 = vmatmul.mubr.f32.gmra.mrb[0].mxu0 %v1132
    %v1217 = vpop.f32.mrb[0].mxu0
    %v1218 = vadd.f32 %v1125, %v1217
    %v1219 = vpop.f32.mrb[0].mxu0
    %1220 = vmatprep.mubr.f32.mxu0 0.0
    %1221 = vmatmul.mubr.f32.gmra.mrb[0].mxu0 %v1135
    %v1222 = vpop.f32.mrb[0].mxu0
    %v1223 = vadd.f32 %v1125, %v1222
    %v1224 = vpop.f32.mrb[0].mxu0
    %1225 = vmatprep.mubr.f32.mxu0 0.0
    %1226 = vmatmul.mubr.f32.gmra.mrb[0].mxu0 %v1138
    %v1227 = vpop.f32.mrb[0].mxu0
    %v1228 = vadd.f32 %v1125, %v1227
    %v1229 = vpop.f32.mrb[0].mxu0
    %1230 = vmatprep.mubr.f32.mxu0 0.0
    %1231 = vmatmul.mubr.f32.gmra.mrb[0].mxu0 %v1141
    %v1232 = vpop.f32.mrb[0].mxu0
    %v1233 = vadd.f32 %v1125, %v1232
    %v1234 = vpop.f32.mrb[0].mxu0
    %1235 = vmatprep.mubr.f32.mxu0 0.0
    %1236 = vmatmul.mubr.f32.gmra.mrb[0].mxu0 %v1144
    %v1237 = vpop.f32.mrb[0].mxu0
    %v1238 = vadd.f32 %v1125, %v1237
    %v1239 = vpop.f32.mrb[0].mxu0
    %1240 = vdwg.mxu0
    %v1241 = vmax.f32 %v1213, 0.0
    %v1242 = vmax.f32 %v1218, 0.0
    %v1243 = vmax.f32 %v1223, 0.0
    %v1244 = vmax.f32 %v1228, 0.0
    %v1245 = vmax.f32 %v1233, 0.0
    %v1246 = vmax.f32 %v1238, 0.0
    %v1247 = vld [vmem:[#allocation13] sm:$0xff]
    %v1248 = vld [vmem:[#allocation13 + $0x8] sm:$0xff]
    %v1249 = vld [vmem:[#allocation13 + $0x10] sm:$0xff]
    %v1250 = vld [vmem:[#allocation13 + $0x18] sm:$0xff]
    %v1251 = vld [vmem:[#allocation13 + $0x20] sm:$0xff]
    %v1252 = vld [vmem:[#allocation13 + $0x28] sm:$0xff]
    %v1253 = vld [vmem:[#allocation13 + $0x30] sm:$0xff]
    %v1254 = vld [vmem:[#allocation13 + $0x38] sm:$0xff]
    %v1255 = vld [vmem:[#allocation14] sm:$0x1]
    %v1257 = vlaneseq
    %v1258 = vshrl.u32 %v1257, 7
    %v1259 = vsub.s32 0, %v1258
    %v1260 = vrot.slane %v1255, %v1259
    %v1263 = vsel %vm1127, %v1241, 0
    %v1266 = vsel %vm1127, %v1242, 0
    %v1269 = vsel %vm1127, %v1243, 0
    %v1272 = vsel %vm1127, %v1244, 0
    %v1275 = vsel %vm1127, %v1245, 0
    %v1278 = vsel %vm1127, %v1246, 0
    %1280 = vmatprep.subr.mxu0 0.0
    %1281 = vmatpush1.msra.mxu0 %v1247
    %1282 = vmatprep.subr.mxu0 0.0
    %1283 = vmatpush1.msra.mxu0 %v1248
    %1284 = vmatprep.subr.mxu0 0.0
    %1285 = vmatpush1.msra.mxu0 %v1249
    %1286 = vmatprep.subr.mxu0 0.0
    %1287 = vmatpush1.msra.mxu0 %v1250
    %1288 = vmatprep.subr.mxu0 0.0
    %1289 = vmatpush1.msra.mxu0 %v1251
    %1290 = vmatprep.subr.mxu0 0.0
    %1291 = vmatpush1.msra.mxu0 %v1252
    %1292 = vmatprep.subr.mxu0 0.0
    %1293 = vmatpush1.msra.mxu0 %v1253
    %1294 = vmatprep.subr.mxu0 0.0
    %1295 = vmatpush1.msra.mxu0 %v1254
    %1296 = vmatprep.subr.mxu0 0.0
    %1297 = vmatpush1.msra.mxu0 0.0
    %1298 = vmatprep.subr.mxu0 0.0
    %1299 = vmatpush1.msra.mxu0 0.0
    %1300 = vmatprep.subr.mxu0 0.0
    %1301 = vmatpush1.msra.mxu0 0.0
    %1302 = vmatprep.subr.mxu0 0.0
    %1303 = vmatpush1.msra.mxu0 0.0
    %1304 = vmatprep.subr.mxu0 0.0
    %1305 = vmatpush1.msra.mxu0 0.0
    %1306 = vmatprep.subr.mxu0 0.0
    %1307 = vmatpush1.msra.mxu0 0.0
    %1308 = vmatprep.subr.mxu0 0.0
    %1309 = vmatpush1.msra.mxu0 0.0
    %1310 = vmatprep.subr.mxu0 0.0
    %1311 = vmatpush1.msra.mxu0 0.0
    %1312 = vmatprep.subr.mxu0 0.0
    %1313 = vmatpush1.msra.mxu0 0.0
    %1314 = vmatprep.subr.mxu0 0.0
    %1315 = vmatpush1.msra.mxu0 0.0
    %1316 = vmatprep.subr.mxu0 0.0
    %1317 = vmatpush1.msra.mxu0 0.0
    %1318 = vmatprep.subr.mxu0 0.0
    %1319 = vmatpush1.msra.mxu0 0.0
    %1320 = vmatprep.subr.mxu0 0.0
    %1321 = vmatpush1.msra.mxu0 0.0
    %1322 = vmatprep.subr.mxu0 0.0
    %1323 = vmatpush1.msra.mxu0 0.0
    %1324 = vmatprep.subr.mxu0 0.0
    %1325 = vmatpush1.msra.mxu0 0.0
    %1326 = vmatprep.subr.mxu0 0.0
    %1327 = vmatpush1.msra.mxu0 0.0
    %1328 = vmatprep.subr.mxu0 0.0
    %1329 = vmatpush1.msra.mxu0 0.0
    %1330 = vmatprep.subr.mxu0 0.0
    %1331 = vmatpush1.msra.mxu0 0.0
    %1332 = vmatprep.subr.mxu0 0.0
    %1333 = vmatpush1.msra.mxu0 0.0
    %1334 = vmatprep.subr.mxu0 0.0
    %1335 = vmatpush1.msra.mxu0 0.0
    %1336 = vmatprep.subr.mxu0 0.0
    %1337 = vmatpush1.msra.mxu0 0.0
    %1338 = vmatprep.subr.mxu0 0.0
    %1339 = vmatpush1.msra.mxu0 0.0
    %1340 = vmatprep.subr.mxu0 0.0
    %1341 = vmatpush1.msra.mxu0 0.0
    %1342 = vmatprep.subr.mxu0 0.0
    %1343 = vmatpush1.msra.mxu0 0.0
    %1344 = vmatprep.mubr.f32.mxu0 0.0
    %1345 = vmatmul.mubr.f32.gmra.mrb[0].mxu0 %v1263
    %v1346 = vpop.f32.mrb[0].mxu0
    %v1347 = vadd.f32 %v1260, %v1346
    %v1348 = vpop.f32.mrb[0].mxu0
    %1349 = vmatprep.mubr.f32.mxu0 0.0
    %1350 = vmatmul.mubr.f32.gmra.mrb[0].mxu0 %v1266
    %v1351 = vpop.f32.mrb[0].mxu0
    %v1352 = vadd.f32 %v1260, %v1351
    %v1353 = vpop.f32.mrb[0].mxu0
    %1354 = vmatprep.mubr.f32.mxu0 0.0
    %1355 = vmatmul.mubr.f32.gmra.mrb[0].mxu0 %v1269
    %v1356 = vpop.f32.mrb[0].mxu0
    %v1357 = vadd.f32 %v1260, %v1356
    %v1358 = vpop.f32.mrb[0].mxu0
    %1359 = vmatprep.mubr.f32.mxu0 0.0
    %1360 = vmatmul.mubr.f32.gmra.mrb[0].mxu0 %v1272
    %v1361 = vpop.f32.mrb[0].mxu0
    %v1362 = vadd.f32 %v1260, %v1361
    %v1363 = vpop.f32.mrb[0].mxu0
    %1364 = vmatprep.mubr.f32.mxu0 0.0
    %1365 = vmatmul.mubr.f32.gmra.mrb[0].mxu0 %v1275
    %v1366 = vpop.f32.mrb[0].mxu0
    %v1367 = vadd.f32 %v1260, %v1366
    %v1368 = vpop.f32.mrb[0].mxu0
    %1369 = vmatprep.mubr.f32.mxu0 0.0
    %1370 = vmatmul.mubr.f32.gmra.mrb[0].mxu0 %v1278
    %v1371 = vpop.f32.mrb[0].mxu0
    %v1372 = vadd.f32 %v1260, %v1371
    %v1373 = vpop.f32.mrb[0].mxu0
    %1374 = vdwg.mxu0
    %v1375 = vmax.f32 %v1347, 0.0
    %v1376 = vmax.f32 %v1352, 0.0
    %v1377 = vmax.f32 %v1357, 0.0
    %v1378 = vmax.f32 %v1362, 0.0
    %v1379 = vmax.f32 %v1367, 0.0
    %v1380 = vmax.f32 %v1372, 0.0
    %v1381 = vld [vmem:[%s16] sm:$0xff]
    %v1382 = vld [vmem:[%s16 + $0x8] sm:$0xff]
    %v1383 = vld [vmem:[%s16 + $0x10] sm:$0xff]
    %v1384 = vld [vmem:[%s16 + $0x18] sm:$0xff]
    %v1385 = vld [vmem:[%s16 + $0x20] sm:$0xff]
    %v1386 = vld [vmem:[%s16 + $0x28] sm:$0xff]
    %v1387 = vld [vmem:[%s16 + $0x30] sm:$0xff]
    %v1388 = vld [vmem:[%s16 + $0x38] sm:$0xff]
    %v1389 = vld [vmem:[#allocation16] sm:$0x1]
    %v1391 = vlaneseq
    %v1392 = vshrl.u32 %v1391, 7
    %v1393 = vsub.s32 0, %v1392
    %v1394 = vrot.slane %v1389, %v1393
    %v1397 = vsel %vm1127, %v1375, 0
    %v1400 = vsel %vm1127, %v1376, 0
    %v1403 = vsel %vm1127, %v1377, 0
    %v1406 = vsel %vm1127, %v1378, 0
    %v1409 = vsel %vm1127, %v1379, 0
    %v1412 = vsel %vm1127, %v1380, 0
    %1414 = vmatprep.subr.mxu0 0.0
    %1415 = vmatpush1.msra.mxu0 %v1381
    %1416 = vmatprep.subr.mxu0 0.0
    %1417 = vmatpush1.msra.mxu0 %v1382
    %1418 = vmatprep.subr.mxu0 0.0
    %1419 = vmatpush1.msra.mxu0 %v1383
    %1420 = vmatprep.subr.mxu0 0.0
    %1421 = vmatpush1.msra.mxu0 %v1384
    %1422 = vmatprep.subr.mxu0 0.0
    %1423 = vmatpush1.msra.mxu0 %v1385
    %1424 = vmatprep.subr.mxu0 0.0
    %1425 = vmatpush1.msra.mxu0 %v1386
    %1426 = vmatprep.subr.mxu0 0.0
    %1427 = vmatpush1.msra.mxu0 %v1387
    %1428 = vmatprep.subr.mxu0 0.0
    %1429 = vmatpush1.msra.mxu0 %v1388
    %1430 = vmatprep.subr.mxu0 0.0
    %1431 = vmatpush1.msra.mxu0 0.0
    %1432 = vmatprep.subr.mxu0 0.0
    %1433 = vmatpush1.msra.mxu0 0.0
    %1434 = vmatprep.subr.mxu0 0.0
    %1435 = vmatpush1.msra.mxu0 0.0
    %1436 = vmatprep.subr.mxu0 0.0
    %1437 = vmatpush1.msra.mxu0 0.0
    %1438 = vmatprep.subr.mxu0 0.0
    %1439 = vmatpush1.msra.mxu0 0.0
    %1440 = vmatprep.subr.mxu0 0.0
    %1441 = vmatpush1.msra.mxu0 0.0
    %1442 = vmatprep.subr.mxu0 0.0
    %1443 = vmatpush1.msra.mxu0 0.0
    %1444 = vmatprep.subr.mxu0 0.0
    %1445 = vmatpush1.msra.mxu0 0.0
    %1446 = vmatprep.subr.mxu0 0.0
    %1447 = vmatpush1.msra.mxu0 0.0
    %1448 = vmatprep.subr.mxu0 0.0
    %1449 = vmatpush1.msra.mxu0 0.0
    %1450 = vmatprep.subr.mxu0 0.0
    %1451 = vmatpush1.msra.mxu0 0.0
    %1452 = vmatprep.subr.mxu0 0.0
    %1453 = vmatpush1.msra.mxu0 0.0
    %1454 = vmatprep.subr.mxu0 0.0
    %1455 = vmatpush1.msra.mxu0 0.0
    %1456 = vmatprep.subr.mxu0 0.0
    %1457 = vmatpush1.msra.mxu0 0.0
    %1458 = vmatprep.subr.mxu0 0.0
    %1459 = vmatpush1.msra.mxu0 0.0
    %1460 = vmatprep.subr.mxu0 0.0
    %1461 = vmatpush1.msra.mxu0 0.0
    %1462 = vmatprep.subr.mxu0 0.0
    %1463 = vmatpush1.msra.mxu0 0.0
    %1464 = vmatprep.subr.mxu0 0.0
    %1465 = vmatpush1.msra.mxu0 0.0
    %1466 = vmatprep.subr.mxu0 0.0
    %1467 = vmatpush1.msra.mxu0 0.0
    %1468 = vmatprep.subr.mxu0 0.0
    %1469 = vmatpush1.msra.mxu0 0.0
    %1470 = vmatprep.subr.mxu0 0.0
    %1471 = vmatpush1.msra.mxu0 0.0
    %1472 = vmatprep.subr.mxu0 0.0
    %1473 = vmatpush1.msra.mxu0 0.0
    %1474 = vmatprep.subr.mxu0 0.0
    %1475 = vmatpush1.msra.mxu0 0.0
    %1476 = vmatprep.subr.mxu0 0.0
    %1477 = vmatpush1.msra.mxu0 0.0
    %1478 = vmatprep.mubr.f32.mxu0 0.0
    %1479 = vmatmul.mubr.f32.gmra.mrb[0].mxu0 %v1397
    %v1480 = vpop.f32.mrb[0].mxu0
    %v1481 = vadd.f32 %v1394, %v1480
    %v1482 = vpop.f32.mrb[0].mxu0
    %1483 = vmatprep.mubr.f32.mxu0 0.0
    %1484 = vmatmul.mubr.f32.gmra.mrb[0].mxu0 %v1400
    %v1485 = vpop.f32.mrb[0].mxu0
    %v1486 = vadd.f32 %v1394, %v1485
    %v1487 = vpop.f32.mrb[0].mxu0
    %1488 = vmatprep.mubr.f32.mxu0 0.0
    %1489 = vmatmul.mubr.f32.gmra.mrb[0].mxu0 %v1403
    %v1490 = vpop.f32.mrb[0].mxu0
    %v1491 = vadd.f32 %v1394, %v1490
    %v1492 = vpop.f32.mrb[0].mxu0
    %1493 = vmatprep.mubr.f32.mxu0 0.0
    %1494 = vmatmul.mubr.f32.gmra.mrb[0].mxu0 %v1406
    %v1495 = vpop.f32.mrb[0].mxu0
    %v1496 = vadd.f32 %v1394, %v1495
    %v1497 = vpop.f32.mrb[0].mxu0
    %1498 = vmatprep.mubr.f32.mxu0 0.0
    %1499 = vmatmul.mubr.f32.gmra.mrb[0].mxu0 %v1409
    %v1500 = vpop.f32.mrb[0].mxu0
    %v1501 = vadd.f32 %v1394, %v1500
    %v1502 = vpop.f32.mrb[0].mxu0
    %1503 = vmatprep.mubr.f32.mxu0 0.0
    %1504 = vmatmul.mubr.f32.gmra.mrb[0].mxu0 %v1412
    %v1505 = vpop.f32.mrb[0].mxu0
    %v1506 = vadd.f32 %v1394, %v1505
    %v1507 = vpop.f32.mrb[0].mxu0
    %1508 = vdwg.mxu0
    %v1509 = vmax.f32 %v1481, 0.0
    %v1510 = vmax.f32 %v1486, 0.0
    %v1511 = vmax.f32 %v1491, 0.0
    %v1512 = vmax.f32 %v1496, 0.0
    %v1513 = vmax.f32 %v1501, 0.0
    %v1514 = vmax.f32 %v1506, 0.0
    %v1515 = vld [vmem:[%s18] sm:$0x1]
    %v1517 = vlaneseq
    %v1518 = vshrl.u32 %v1517, 7
    %v1519 = vsub.s32 0, %v1518
    %v1520 = vrot.slane %v1515, %v1519
    %v1522 = vmul.f32 %v1509, %v1520
    %v1523 = vmul.f32 %v1510, %v1520
    %v1524 = vmul.f32 %v1511, %v1520
    %v1525 = vmul.f32 %v1512, %v1520
    %v1526 = vmul.f32 %v1513, %v1520
    %v1527 = vmul.f32 %v1514, %v1520
    %v1528 = vsel %vm1127, %v1522, 0.0
    %1529 = vadd.xlane.f32.xlu0 %v1528
    %v1530 = vpop.xlane.xlu0 %1529
    %v1531 = vsel %vm1127, %v1523, 0.0
    %1532 = vadd.xlane.f32.xlu0 %v1531
    %v1533 = vpop.xlane.xlu0 %1532
    %v1534 = vsel %vm1127, %v1524, 0.0
    %1535 = vadd.xlane.f32.xlu0 %v1534
    %v1536 = vpop.xlane.xlu0 %1535
    %v1537 = vsel %vm1127, %v1525, 0.0
    %1538 = vadd.xlane.f32.xlu0 %v1537
    %v1539 = vpop.xlane.xlu0 %1538
    %v1540 = vsel %vm1127, %v1526, 0.0
    %1541 = vadd.xlane.f32.xlu0 %v1540
    %v1542 = vpop.xlane.xlu0 %1541
    %v1543 = vsel %vm1127, %v1527, 0.0
    %1544 = vadd.xlane.f32.xlu0 %v1543
    %v1545 = vpop.xlane.xlu0 %1544
    %v1546 = vld [vmem:[#allocation2] sm:$0x1]
    %v1548 = vlaneseq
    %v1549 = vshrl.u32 %v1548, 7
    %v1550 = vsub.s32 0, %v1549
    %v1551 = vrot.slane %v1546, %v1550
    %v1553 = vadd.f32 %v1530, %v1551
    %v1554 = vadd.f32 %v1533, %v1551
    %v1555 = vadd.f32 %v1536, %v1551
    %v1556 = vadd.f32 %v1539, %v1551
    %v1557 = vadd.f32 %v1542, %v1551
    %v1558 = vadd.f32 %v1545, %v1551
    %v1559 = vsub.f32 %v1084, %v175
    %v1560 = vsub.f32 %v1089, %v176
    %v1561 = vsub.f32 %v1094, %v177
    %v1562 = vsub.f32 %v1099, %v178
    %v1563 = vsub.f32 %v1104, %v179
    %v1564 = vsub.f32 %v1109, %v180
    %v1565 = vmul.f32 %v1559, %v1559
    %v1566 = vmul.f32 %v1560, %v1560
    %v1567 = vmul.f32 %v1561, %v1561
    %v1568 = vmul.f32 %v1562, %v1562
    %v1569 = vmul.f32 %v1563, %v1563
    %v1570 = vmul.f32 %v1564, %v1564
    %v1571 = vsel %vm201, %v1565, 0.0
    %1572 = vadd.xlane.f32.xlu0 %v1571
    %v1573 = vpop.xlane.xlu0 %1572
    %v1574 = vsel %vm201, %v1566, 0.0
    %1575 = vadd.xlane.f32.xlu0 %v1574
    %v1576 = vpop.xlane.xlu0 %1575
    %v1577 = vsel %vm201, %v1567, 0.0
    %1578 = vadd.xlane.f32.xlu0 %v1577
    %v1579 = vpop.xlane.xlu0 %1578
    %v1580 = vsel %vm201, %v1568, 0.0
    %1581 = vadd.xlane.f32.xlu0 %v1580
    %v1582 = vpop.xlane.xlu0 %1581
    %v1583 = vsel %vm201, %v1569, 0.0
    %1584 = vadd.xlane.f32.xlu0 %v1583
    %v1585 = vpop.xlane.xlu0 %1584
    %v1586 = vsel %vm201, %v1570, 0.0
    %1587 = vadd.xlane.f32.xlu0 %v1586
    %v1588 = vpop.xlane.xlu0 %1587
    %v1589 = vadd.f32 %v439, 1.0
    %v1590 = vadd.f32 %v444, 1.0
    %v1591 = vadd.f32 %v449, 1.0
    %v1592 = vadd.f32 %v454, 1.0
    %v1593 = vadd.f32 %v459, 1.0
    %v1594 = vadd.f32 %v464, 1.0
    %v1595 = vmul.f32 %v439, %v439
    %v1596 = vmul.f32 %v444, %v444
    %v1597 = vmul.f32 %v449, %v449
    %v1598 = vmul.f32 %v454, %v454
    %v1599 = vmul.f32 %v459, %v459
    %v1600 = vmul.f32 %v464, %v464
    %1607 = vrot.lane.b32.xlu0 %v1595, 4
    %v1608 = vpop.permute.xlu0 %1607
    %1609 = vrot.lane.b32.xlu0 %v1596, 4
    %v1610 = vpop.permute.xlu0 %1609
    %1611 = vrot.lane.b32.xlu0 %v1597, 4
    %v1612 = vpop.permute.xlu0 %1611
    %1613 = vrot.lane.b32.xlu0 %v1598, 4
    %v1614 = vpop.permute.xlu0 %1613
    %1615 = vrot.lane.b32.xlu0 %v1599, 4
    %v1616 = vpop.permute.xlu0 %1615
    %1617 = vrot.lane.b32.xlu0 %v1600, 4
    %v1618 = vpop.permute.xlu0 %1617
    %v1625 = vsub.f32 %v1589, %v1608
    %v1626 = vsub.f32 %v1590, %v1610
    %v1627 = vsub.f32 %v1591, %v1612
    %v1628 = vsub.f32 %v1592, %v1614
    %v1629 = vsub.f32 %v1593, %v1616
    %v1630 = vsub.f32 %v1594, %v1618
    %v1631 = vmul.f32 %v474, %v474
    %v1632 = vmul.f32 %v476, %v476
    %v1633 = vmul.f32 %v478, %v478
    %v1634 = vmul.f32 %v480, %v480
    %v1635 = vmul.f32 %v482, %v482
    %v1636 = vmul.f32 %v484, %v484
    %v1637 = vsub.f32 %v1625, %v1631
    %v1638 = vsub.f32 %v1626, %v1632
    %v1639 = vsub.f32 %v1627, %v1633
    %v1640 = vsub.f32 %v1628, %v1634
    %v1641 = vsub.f32 %v1629, %v1635
    %v1642 = vsub.f32 %v1630, %v1636
    %1649 = vrot.lane.b32.xlu0 %v1637, 124
    %v1650 = vpop.permute.xlu0 %1649
    %1651 = vrot.lane.b32.xlu0 %v1638, 124
    %v1652 = vpop.permute.xlu0 %1651
    %1653 = vrot.lane.b32.xlu0 %v1639, 124
    %v1654 = vpop.permute.xlu0 %1653
    %1655 = vrot.lane.b32.xlu0 %v1640, 124
    %v1656 = vpop.permute.xlu0 %1655
    %1657 = vrot.lane.b32.xlu0 %v1641, 124
    %v1658 = vpop.permute.xlu0 %1657
    %1659 = vrot.lane.b32.xlu0 %v1642, 124
    %v1660 = vpop.permute.xlu0 %1659
    %v1667 = vsel %vm549, %v1650, 0.0
    %1668 = vadd.xlane.f32.xlu0 %v1667
    %v1669 = vpop.xlane.xlu0 %1668
    %v1670 = vsel %vm549, %v1652, 0.0
    %1671 = vadd.xlane.f32.xlu0 %v1670
    %v1672 = vpop.xlane.xlu0 %1671
    %v1673 = vsel %vm549, %v1654, 0.0
    %1674 = vadd.xlane.f32.xlu0 %v1673
    %v1675 = vpop.xlane.xlu0 %1674
    %v1676 = vsel %vm549, %v1656, 0.0
    %1677 = vadd.xlane.f32.xlu0 %v1676
    %v1678 = vpop.xlane.xlu0 %1677
    %v1679 = vsel %vm549, %v1658, 0.0
    %1680 = vadd.xlane.f32.xlu0 %v1679
    %v1681 = vpop.xlane.xlu0 %1680
    %v1682 = vsel %vm549, %v1660, 0.0
    %1683 = vadd.xlane.f32.xlu0 %v1682
    %v1684 = vpop.xlane.xlu0 %1683
    %v1685 = vmul.f32 %v1669, -0.5
    %v1686 = vmul.f32 %v1672, -0.5
    %v1687 = vmul.f32 %v1675, -0.5
    %v1688 = vmul.f32 %v1678, -0.5
    %v1689 = vmul.f32 %v1681, -0.5
    %v1690 = vmul.f32 %v1684, -0.5
    %v1691 = vlaneseq
    %v1692 = vand.u32 %v1691, 127
    %v1693 = vsel %vm549, %v521, 0.0
    %v1694 = vsel %vm549, %v522, 0.0
    %v1695 = vsel %vm549, %v523, 0.0
    %v1696 = vsel %vm549, %v524, 0.0
    %v1697 = vsel %vm549, %v525, 0.0
    %v1698 = vsel %vm549, %v526, 0.0
    %vm1699 = vcmp.eq.s32.totalorder %v1692, 4
    %v1700 = vsel %vm1699, 1, 0
    %v1701 = vcvt.s32.f32 %v1700
    %1703 = vset.pattern.permute.xlu0 0
    %1704 = vperm.xlu0 %1703, %v1553
    %v1705 = vpop.permute.xlu0 %1704
    %1708 = vset.pattern.permute.xlu0 0
    %1709 = vperm.xlu0 %1708, %v1554
    %v1710 = vpop.permute.xlu0 %1709
    %1713 = vset.pattern.permute.xlu0 0
    %1714 = vperm.xlu0 %1713, %v1555
    %v1715 = vpop.permute.xlu0 %1714
    %1718 = vset.pattern.permute.xlu0 0
    %1719 = vperm.xlu0 %1718, %v1556
    %v1720 = vpop.permute.xlu0 %1719
    %1723 = vset.pattern.permute.xlu0 0
    %1724 = vperm.xlu0 %1723, %v1557
    %v1725 = vpop.permute.xlu0 %1724
    %1728 = vset.pattern.permute.xlu0 0
    %1729 = vperm.xlu0 %1728, %v1558
    %v1730 = vpop.permute.xlu0 %1729
    %v1732 = vmul.f32 %v1705, %v1701
    %v1733 = vmul.f32 %v1710, %v1701
    %v1734 = vmul.f32 %v1715, %v1701
    %v1735 = vmul.f32 %v1720, %v1701
    %v1736 = vmul.f32 %v1725, %v1701
    %v1737 = vmul.f32 %v1730, %v1701
    %v1738 = vadd.f32 %v1693, %v1732
    %v1739 = vadd.f32 %v1694, %v1733
    %v1740 = vadd.f32 %v1695, %v1734
    %v1741 = vadd.f32 %v1696, %v1735
    %v1742 = vadd.f32 %v1697, %v1736
    %v1743 = vadd.f32 %v1698, %v1737
    %vm1744 = vcmp.eq.s32.totalorder %v1692, 5
    %v1745 = vsel %vm1744, 1, 0
    %v1746 = vcvt.s32.f32 %v1745
    %v1747 = vmul.f32 %v1573, %v1746
    %v1748 = vmul.f32 %v1576, %v1746
    %v1749 = vmul.f32 %v1579, %v1746
    %v1750 = vmul.f32 %v1582, %v1746
    %v1751 = vmul.f32 %v1585, %v1746
    %v1752 = vmul.f32 %v1588, %v1746
    %v1753 = vadd.f32 %v1738, %v1747
    %v1754 = vadd.f32 %v1739, %v1748
    %v1755 = vadd.f32 %v1740, %v1749
    %v1756 = vadd.f32 %v1741, %v1750
    %v1757 = vadd.f32 %v1742, %v1751
    %v1758 = vadd.f32 %v1743, %v1752
    %vm1759 = vcmp.eq.s32.totalorder %v1692, 6
    %v1760 = vsel %vm1759, 1, 0
    %v1761 = vcvt.s32.f32 %v1760
    %v1762 = vmul.f32 %v1685, %v1761
    %v1763 = vmul.f32 %v1686, %v1761
    %v1764 = vmul.f32 %v1687, %v1761
    %v1765 = vmul.f32 %v1688, %v1761
    %v1766 = vmul.f32 %v1689, %v1761
    %v1767 = vmul.f32 %v1690, %v1761
    %v1768 = vadd.f32 %v1753, %v1762
    %v1769 = vadd.f32 %v1754, %v1763
    %v1770 = vadd.f32 %v1755, %v1764
    %v1771 = vadd.f32 %v1756, %v1765
    %v1772 = vadd.f32 %v1757, %v1766
    %v1773 = vadd.f32 %v1758, %v1767
    %vm1774 = vcmask 64512
    %1775 = vst.msk [vmem:[%s20] sm:$0xff] %vm1774, %v1768
    %1776 = vst.msk [vmem:[%s20 + $0x8] sm:$0xff] %vm1774, %v1769
    %1777 = vst.msk [vmem:[%s20 + $0x10] sm:$0xff] %vm1774, %v1770
    %1778 = vst.msk [vmem:[%s20 + $0x18] sm:$0xff] %vm1774, %v1771
    %1779 = vst.msk [vmem:[%s20 + $0x20] sm:$0xff] %vm1774, %v1772
    %1780 = vst.msk [vmem:[%s20 + $0x28] sm:$0xff] %vm1774, %v1773
    // Predicated region
    $region118: #{_forward_impl.1} parent=1 // pred_check
      _
    $region119: #{_forward_impl.1} parent=1 // pred_check_branch
      %1782 = sbr.rel (0) target = $region121
    $region120: #{_forward_impl.1} parent=1 // pred_region
      _
    $region121: #{_forward_impl.1} parent=1 // pred_fallthru
      _
    // Predicated region
    $region122: #{_forward_impl.1} parent=1 // pred_check
      _
    $region123: #{_forward_impl.1} parent=1 // pred_check_branch
      %1784 = sbr.rel (0) target = $region125
    $region124: #{_forward_impl.1} parent=1 // pred_region
      _
    $region125: #{_forward_impl.1} parent=1 // pred_fallthru
      _
    %1785 = vsyncpa [#allocation4], 1
    %1786 = vsyncpa [#allocation6], 1
    %1787 = vsyncpa [#allocation9], 1
    %1788 = vsyncpa [#allocation12], 1
    %1789 = vsyncpa [#allocation15], 1

</llo_original>
